<compile_context>
chip_gen: v6e
topology: v6e:2x2x1
jax: 0.10.0
libtpu: 0.0.40
codegen_flags: <defaults>
</compile_context>

<pallas_src>
import functools
import numpy as np
import jax
import jax.numpy as jnp
from jax.experimental import pallas as pl
from jax.experimental.pallas import tpu as pltpu


def round_up(x, m):
    return (x + m - 1) // m * m


# ----------------------------------------------------------------------------
# Architecture derivation (mirrors the PyTorch module __init__ logic)
# ----------------------------------------------------------------------------
def generate_hidden_dims(hidden_dim, latent_dim, depth, strategy="linear",
                         order="decreasing"):
    """Linear strategy: linearly interpolate widths from hidden_dim to latent_dim."""
    dims = np.linspace(hidden_dim, latent_dim, depth + 1).round().astype(int)
    if order == "increasing":
        dims = dims[::-1]
    return list(zip(dims[:-1], dims[1:]))


def build_vae_config(input_dim=30, depth=3, hidden_dim=64, latent_dim=10):
    enc_dims = [(input_dim, hidden_dim)] + generate_hidden_dims(
        hidden_dim, latent_dim, depth, strategy="linear", order="decreasing")
    hidden_out_dim = enc_dims[-1][1]
    enc_dim_list = enc_dims + [(hidden_out_dim, latent_dim)]
    dec_dim_list = [(o, i) for (i, o) in enc_dim_list[::-1]]
    dec_body_dims = dec_dim_list[:-1]   # Linear+BN+LeakyReLU+Dropout blocks
    dec_out_dims = dec_dim_list[-1]     # output_layer
    return enc_dims, hidden_out_dim, dec_body_dims, dec_out_dims


# ----------------------------------------------------------------------------
# Raw (PyTorch-equivalent) parameters + packing with BN folding
# ----------------------------------------------------------------------------
def init_raw_params(key, enc_dims, hidden_out_dim, latent_dim, dec_body_dims,
                    dec_out_dims):
    meta = {"enc": [], "mu": None, "lv": None, "dec": [], "out": None}

    def linear(k, din, dout, scale=0.1):
        kw, kb = jax.random.split(k)
        w = (scale * jax.random.normal(kw, (din, dout))).astype(jnp.float32)
        b = (scale * jax.random.normal(kb, (dout,))).astype(jnp.float32)
        return w, b

    def bn(k, dim):
        kg, kb, km, kv = jax.random.split(k, 4)
        gamma = (1.0 + 0.05 * jax.random.normal(kg, (dim,))).astype(jnp.float32)
        beta = (0.05 * jax.random.normal(kb, (dim,))).astype(jnp.float32)
        mean = (0.05 * jax.random.normal(km, (dim,))).astype(jnp.float32)
        var = jnp.exp(0.1 * jax.random.normal(kv, (dim,))).astype(jnp.float32)
        return (gamma, beta, mean, var)

    keys = jax.random.split(key, 64)
    ki = 0
    for (din, dout) in enc_dims:
        w, b = linear(keys[ki], din, dout); ki += 1
        g = bn(keys[ki], dout); ki += 1
        meta["enc"].append((w, b, g))
    meta["mu"] = linear(keys[ki], hidden_out_dim, latent_dim); ki += 1
    meta["lv"] = linear(keys[ki], hidden_out_dim, latent_dim); ki += 1
    for (din, dout) in dec_body_dims:
        w, b = linear(keys[ki], din, dout); ki += 1
        g = bn(keys[ki], dout); ki += 1
        meta["dec"].append((w, b, g))
    meta["out"] = linear(keys[ki], dec_out_dims[0], dec_out_dims[1]); ki += 1
    return meta


def pack_params(meta, lane=128):
    """Fold BN into Linear, zero-pad each layer to (P, 128k), pack lane-wise."""
    all_lin = ([(w, b) for (w, b, g) in meta["enc"]]
               + [meta["mu"], meta["lv"]]
               + [(w, b) for (w, b, g) in meta["dec"]]
               + [meta["out"]])
    max_dim = max(max(w.shape) for (w, _) in all_lin)
    P = round_up(max_dim, lane)

    def fold(w, b, g):
        gamma, beta, mean, var = g
        s = gamma * jax.lax.rsqrt(var + 1e-5)
        return w * s[None, :], (b - mean) * s + beta

    w_blocks, b_blocks = [], []
    cur = 0

    def add_block(w, b, width):
        nonlocal cur
        din, dout = w.shape
        wp = jnp.zeros((P, width), jnp.float32).at[:din, :dout].set(w)
        bp = jnp.zeros((1, width), jnp.float32).at[0, :dout].set(b)
        w_blocks.append(wp)
        b_blocks.append(bp)
        off = cur
        cur += width
        return off

    enc_offs = []
    for (w, b, g) in meta["enc"]:
        wf, bf = fold(w, b, g)
        enc_offs.append(add_block(wf, bf, P))

    # Fused mu|logvar head: mu occupies lanes [0:latent) of the first P-wide
    # half, logvar occupies lanes [0:latent) of the second P-wide half.
    mu_w, mu_b = meta["mu"]
    lv_w, lv_b = meta["lv"]
    din, latent = mu_w.shape
    hw = (jnp.zeros((P, 2 * P), jnp.float32)
          .at[:din, :latent].set(mu_w)
          .at[:din, P:P + latent].set(lv_w))
    hb = (jnp.zeros((1, 2 * P), jnp.float32)
          .at[0, :latent].set(mu_b)
          .at[0, P:P + latent].set(lv_b))
    w_blocks.append(hw)
    b_blocks.append(hb)
    head_off = cur
    cur += 2 * P

    dec_offs = []
    for (w, b, g) in meta["dec"]:
        wf, bf = fold(w, b, g)
        dec_offs.append(add_block(wf, bf, P))

    ow, ob = meta["out"]
    out_off = add_block(ow, ob, P)

    w_pack = jnp.concatenate(w_blocks, axis=1)
    b_pack = jnp.concatenate(b_blocks, axis=1)

    cfg = dict(
        P=P,
        enc_offs=enc_offs,
        head_off=head_off,
        dec_offs=dec_offs,
        out_off=out_off,
        total=cur,
        input_dim=int(meta["out"][0].shape[1]),
        latent_dim=int(latent),
        real_dims=[tuple(int(d) for d in w.shape) for (w, _) in all_lin],
    )
    return w_pack, b_pack, cfg


# ----------------------------------------------------------------------------
# Pallas kernel: encoder -> reparameterize -> decoder on one batch tile
# ----------------------------------------------------------------------------
def vae_kernel(cfg, x_ref, eps_ref, w_ref, b_ref, out_ref):
    P = cfg["P"]

    def dense(h, off, width):
        w = w_ref[:, off:off + width]          # static, 128-aligned lane slice
        b = b_ref[:, off:off + width]
        return jnp.dot(h, w, preferred_element_type=jnp.float32) + b

    def leaky(h):                              # LeakyReLU(0.01): single VALU max
        return jnp.maximum(h, 0.01 * h)

    # ---- encoder body (Linear+BN folded, LeakyReLU; Dropout = identity) ----
    h = x_ref[...]
    for off in cfg["enc_offs"]:
        h = leaky(dense(h, off, P))

    # ---- fused mu|logvar head (one MXU dot) ----
    hm = dense(h, cfg["head_off"], 2 * P)
    mu = hm[:, :P]                             # vreg-aligned slice
    logvar = hm[:, P:]

    # ---- reparameterize: z = mu + eps * exp(0.5*logvar) ----
    # Padded lanes: mu=0, logvar=0 -> exp=1, eps=0  =>  z padded lanes stay 0.
    z = mu + eps_ref[...] * jnp.exp(0.5 * logvar)

    # ---- decoder body + output layer ----
    hd = z
    for off in cfg["dec_offs"]:
        hd = leaky(dense(hd, off, P))
    recon = dense(hd, cfg["out_off"], P)

    # Single lane-dense (TB, 4P) store; 128-aligned concat (no lane shuffles).
    out_ref[...] = jnp.concatenate([recon, mu, logvar, z],
                                   axis=-1).astype(out_ref.dtype)


# ----------------------------------------------------------------------------
# Wrapper: batch grid, resident packed weights, lane-dense packed output
# ----------------------------------------------------------------------------
def vae_forward(x, eps, w_pack, b_pack, cfg, block_rows=256):
    B, input_dim = x.shape
    latent = eps.shape[1]
    P = cfg["P"]
    total = cfg["total"]

    TB = min(int(block_rows), round_up(B, 8))
    Bp = round_up(B, TB)

    # Pad activations to 128 lanes (zero pad) and batch to a multiple of TB.
    x_p = jnp.zeros((Bp, P), jnp.float32).at[:B, :input_dim].set(x)
    eps_p = jnp.zeros((Bp, P), jnp.float32).at[:B, :latent].set(eps)

    flops = 2 * Bp * sum(din * dout for (din, dout) in cfg["real_dims"])
    bytes_accessed = 4 * (x_p.size + eps_p.size + Bp * 4 * P
                          + w_pack.size + b_pack.size)
    cost = pl.CostEstimate(flops=int(flops),
                           transcendentals=int(Bp * latent),
                           bytes_accessed=int(bytes_accessed))

    out = pl.pallas_call(
        functools.partial(vae_kernel, cfg),
        out_shape=jax.ShapeDtypeStruct((Bp, 4 * P), jnp.float32),
        grid=(Bp // TB,),
        in_specs=[
            pl.BlockSpec((TB, P), lambda i: (i, 0)),      # x tile
            pl.BlockSpec((TB, P), lambda i: (i, 0)),      # eps tile
            pl.BlockSpec((P, total), lambda i: (0, 0)),   # packed weights (resident)
            pl.BlockSpec((1, total), lambda i: (0, 0)),   # packed biases (resident)
        ],
        out_specs=pl.BlockSpec((TB, 4 * P), lambda i: (i, 0)),
        compiler_params=pltpu.CompilerParams(
            dimension_semantics=("parallel",)),
        cost_estimate=cost,
    )(x_p, eps_p, w_pack, b_pack)

    recon = out[:B, 0:input_dim]
    mu = out[:B, P:P + latent]
    logvar = out[:B, 2 * P:2 * P + latent]
    z = out[:B, 3 * P:3 * P + latent]
    return recon, mu, logvar, z


# ----------------------------------------------------------------------------
# Pure-JAX reference (unfolded eval-mode BN) for correctness checking
# ----------------------------------------------------------------------------
def reference_forward(x, eps, meta):
    def block(h, w, b, g):
        h = h @ w + b
        gamma, beta, mean, var = g
        h = gamma * (h - mean) / jnp.sqrt(var + 1e-5) + beta
        return jnp.where(h >= 0.0, h, 0.01 * h)

    h = x
    for (w, b, g) in meta["enc"]:
        h = block(h, w, b, g)
    mu = h @ meta["mu"][0] + meta["mu"][1]
    logvar = h @ meta["lv"][0] + meta["lv"][1]
    z = mu + eps * jnp.exp(0.5 * logvar)
    hd = z
    for (w, b, g) in meta["dec"]:
        hd = block(hd, w, b, g)
    recon = hd @ meta["out"][0] + meta["out"][1]
    return recon, mu, logvar, z


# ----------------------------------------------------------------------------
if __name__ == "__main__":
    input_dim, depth, hidden_dim, latent_dim = 30, 3, 64, 10
    B = 16

    enc_dims, hidden_out_dim, dec_body_dims, dec_out_dims = build_vae_config(
        input_dim, depth, hidden_dim, latent_dim)

    key = jax.random.PRNGKey(0)
    kx, keps, kp = jax.random.split(key, 3)
    x = jax.random.normal(kx, (B, input_dim), dtype=jnp.float32)
    eps = jax.random.normal(keps, (B, latent_dim), dtype=jnp.float32)

    meta = init_raw_params(kp, enc_dims, hidden_out_dim, latent_dim,
                           dec_body_dims, dec_out_dims)
    w_pack, b_pack, cfg = pack_params(meta)

    # block_rows=8 -> grid of 2 batch tiles (exercises the batch pipeline);
    # for realistic batches use the default block_rows=256.
    recon, mu, logvar, z = vae_forward(x, eps, w_pack, b_pack, cfg,
                                       block_rows=8)
    jax.block_until_ready((recon, mu, logvar, z))

    r_recon, r_mu, r_logvar, r_z = reference_forward(x, eps, meta)
    np.testing.assert_allclose(np.asarray(recon), np.asarray(r_recon),
                               rtol=1e-4, atol=1e-4)
    np.testing.assert_allclose(np.asarray(mu), np.asarray(r_mu),
                               rtol=1e-4, atol=1e-4)
    np.testing.assert_allclose(np.asarray(logvar), np.asarray(r_logvar),
                               rtol=1e-4, atol=1e-4)
    np.testing.assert_allclose(np.asarray(z), np.asarray(r_z),
                               rtol=1e-4, atol=1e-4)

    print("KERNEL_OK")
</pallas_src>

<mosaic_0001>
module attributes {stable_mosaic.version = 11 : i64} {
  func.func @vae_kernel(%arg0: i32, %arg1: memref<8x128xf32, #tpu.memory_space<vmem>>, %arg2: memref<8x128xf32, #tpu.memory_space<vmem>>, %arg3: memref<128x1408xf32, #tpu.memory_space<vmem>>, %arg4: memref<1x1408xf32, #tpu.memory_space<vmem>>, %arg5: memref<8x512xf32, #tpu.memory_space<vmem>>) attributes {dimension_semantics = [#tpu.dimension_semantics<parallel>], iteration_bounds = array<i64: 2>, scalar_prefetch = 0 : i64, scratch_operands = 0 : i64, tpu.core_type = #tpu.core_type<tc>, window_params = [{transform_indices = @transform_0, window_bounds = array<i64: 8, 128>}, {transform_indices = @transform_1, window_bounds = array<i64: 8, 128>}, {pipeline_mode = #tpu.pipeline_mode<synchronous>, transform_indices = @transform_2, window_bounds = array<i64: 128, 1408>}, {pipeline_mode = #tpu.pipeline_mode<synchronous>, transform_indices = @transform_3, window_bounds = array<i64: 1, 1408>}, {transform_indices = @transform_4, window_bounds = array<i64: 8, 512>}]} {
    %c0 = arith.constant 0 : index
    %c0_0 = arith.constant 0 : index
    %0 = vector.load %arg1[%c0, %c0_0] : memref<8x128xf32, #tpu.memory_space<vmem>>, vector<8x128xf32>
    %c0_1 = arith.constant 0 : index
    %c0_2 = arith.constant 0 : index
    %1 = vector.load %arg3[%c0_1, %c0_2] : memref<128x1408xf32, #tpu.memory_space<vmem>>, vector<128x128xf32>
    %c0_3 = arith.constant 0 : index
    %c0_4 = arith.constant 0 : index
    %2 = vector.load %arg4[%c0_3, %c0_4] : memref<1x1408xf32, #tpu.memory_space<vmem>>, vector<1x128xf32>
    %cst = arith.constant dense<0.000000e+00> : vector<8x128xf32>
    %3 = tpu.matmul %0, %1, %cst {dimension_numbers = #tpu.dot_dimension_numbers<[1], [0], [0], [1], [0, 0, 1, 1], [], []>} : vector<8x128xf32>, vector<128x128xf32>, vector<8x128xf32> -> vector<8x128xf32>
    %4 = vector.broadcast %2 : vector<1x128xf32> to vector<8x128xf32>
    %5 = arith.addf %3, %4 : vector<8x128xf32>
    %cst_5 = arith.constant 0.00999999977 : f32
    %6 = vector.broadcast %cst_5 : f32 to vector<8x128xf32>
    %7 = arith.mulf %6, %5 : vector<8x128xf32>
    %8 = arith.maximumf %5, %7 : vector<8x128xf32>
    %c0_6 = arith.constant 0 : index
    %c128 = arith.constant 128 : index
    %9 = vector.load %arg3[%c0_6, %c128] : memref<128x1408xf32, #tpu.memory_space<vmem>>, vector<128x128xf32>
    %c0_7 = arith.constant 0 : index
    %c128_8 = arith.constant 128 : index
    %10 = vector.load %arg4[%c0_7, %c128_8] : memref<1x1408xf32, #tpu.memory_space<vmem>>, vector<1x128xf32>
    %cst_9 = arith.constant dense<0.000000e+00> : vector<8x128xf32>
    %11 = tpu.matmul %8, %9, %cst_9 {dimension_numbers = #tpu.dot_dimension_numbers<[1], [0], [0], [1], [0, 0, 1, 1], [], []>} : vector<8x128xf32>, vector<128x128xf32>, vector<8x128xf32> -> vector<8x128xf32>
    %12 = vector.broadcast %10 : vector<1x128xf32> to vector<8x128xf32>
    %13 = arith.addf %11, %12 : vector<8x128xf32>
    %cst_10 = arith.constant 0.00999999977 : f32
    %14 = vector.broadcast %cst_10 : f32 to vector<8x128xf32>
    %15 = arith.mulf %14, %13 : vector<8x128xf32>
    %16 = arith.maximumf %13, %15 : vector<8x128xf32>
    %c0_11 = arith.constant 0 : index
    %c256 = arith.constant 256 : index
    %17 = vector.load %arg3[%c0_11, %c256] : memref<128x1408xf32, #tpu.memory_space<vmem>>, vector<128x128xf32>
    %c0_12 = arith.constant 0 : index
    %c256_13 = arith.constant 256 : index
    %18 = vector.load %arg4[%c0_12, %c256_13] : memref<1x1408xf32, #tpu.memory_space<vmem>>, vector<1x128xf32>
    %cst_14 = arith.constant dense<0.000000e+00> : vector<8x128xf32>
    %19 = tpu.matmul %16, %17, %cst_14 {dimension_numbers = #tpu.dot_dimension_numbers<[1], [0], [0], [1], [0, 0, 1, 1], [], []>} : vector<8x128xf32>, vector<128x128xf32>, vector<8x128xf32> -> vector<8x128xf32>
    %20 = vector.broadcast %18 : vector<1x128xf32> to vector<8x128xf32>
    %21 = arith.addf %19, %20 : vector<8x128xf32>
    %cst_15 = arith.constant 0.00999999977 : f32
    %22 = vector.broadcast %cst_15 : f32 to vector<8x128xf32>
    %23 = arith.mulf %22, %21 : vector<8x128xf32>
    %24 = arith.maximumf %21, %23 : vector<8x128xf32>
    %c0_16 = arith.constant 0 : index
    %c384 = arith.constant 384 : index
    %25 = vector.load %arg3[%c0_16, %c384] : memref<128x1408xf32, #tpu.memory_space<vmem>>, vector<128x128xf32>
    %c0_17 = arith.constant 0 : index
    %c384_18 = arith.constant 384 : index
    %26 = vector.load %arg4[%c0_17, %c384_18] : memref<1x1408xf32, #tpu.memory_space<vmem>>, vector<1x128xf32>
    %cst_19 = arith.constant dense<0.000000e+00> : vector<8x128xf32>
    %27 = tpu.matmul %24, %25, %cst_19 {dimension_numbers = #tpu.dot_dimension_numbers<[1], [0], [0], [1], [0, 0, 1, 1], [], []>} : vector<8x128xf32>, vector<128x128xf32>, vector<8x128xf32> -> vector<8x128xf32>
    %28 = vector.broadcast %26 : vector<1x128xf32> to vector<8x128xf32>
    %29 = arith.addf %27, %28 : vector<8x128xf32>
    %cst_20 = arith.constant 0.00999999977 : f32
    %30 = vector.broadcast %cst_20 : f32 to vector<8x128xf32>
    %31 = arith.mulf %30, %29 : vector<8x128xf32>
    %32 = arith.maximumf %29, %31 : vector<8x128xf32>
    %c0_21 = arith.constant 0 : index
    %c512 = arith.constant 512 : index
    %33 = vector.load %arg3[%c0_21, %c512] : memref<128x1408xf32, #tpu.memory_space<vmem>>, vector<128x256xf32>
    %c0_22 = arith.constant 0 : index
    %c512_23 = arith.constant 512 : index
    %34 = vector.load %arg4[%c0_22, %c512_23] : memref<1x1408xf32, #tpu.memory_space<vmem>>, vector<1x256xf32>
    %cst_24 = arith.constant dense<0.000000e+00> : vector<8x256xf32>
    %35 = tpu.matmul %32, %33, %cst_24 {dimension_numbers = #tpu.dot_dimension_numbers<[1], [0], [0], [1], [0, 0, 1, 1], [], []>} : vector<8x128xf32>, vector<128x256xf32>, vector<8x256xf32> -> vector<8x256xf32>
    %36 = vector.broadcast %34 : vector<1x256xf32> to vector<8x256xf32>
    %37 = arith.addf %35, %36 : vector<8x256xf32>
    %38 = vector.extract_strided_slice %37 {offsets = [0, 0], sizes = [8, 128], strides = [1, 1]} : vector<8x256xf32> to vector<8x128xf32>
    %39 = vector.extract_strided_slice %37 {offsets = [0, 128], sizes = [8, 128], strides = [1, 1]} : vector<8x256xf32> to vector<8x128xf32>
    %c0_25 = arith.constant 0 : index
    %c0_26 = arith.constant 0 : index
    %40 = vector.load %arg2[%c0_25, %c0_26] : memref<8x128xf32, #tpu.memory_space<vmem>>, vector<8x128xf32>
    %cst_27 = arith.constant 5.000000e-01 : f32
    %41 = vector.broadcast %cst_27 : f32 to vector<8x128xf32>
    %42 = arith.mulf %41, %39 : vector<8x128xf32>
    %43 = math.exp %42 : vector<8x128xf32>
    %44 = arith.mulf %40, %43 : vector<8x128xf32>
    %45 = arith.addf %38, %44 : vector<8x128xf32>
    %c0_28 = arith.constant 0 : index
    %c768 = arith.constant 768 : index
    %46 = vector.load %arg3[%c0_28, %c768] : memref<128x1408xf32, #tpu.memory_space<vmem>>, vector<128x128xf32>
    %c0_29 = arith.constant 0 : index
    %c768_30 = arith.constant 768 : index
    %47 = vector.load %arg4[%c0_29, %c768_30] : memref<1x1408xf32, #tpu.memory_space<vmem>>, vector<1x128xf32>
    %cst_31 = arith.constant dense<0.000000e+00> : vector<8x128xf32>
    %48 = tpu.matmul %45, %46, %cst_31 {dimension_numbers = #tpu.dot_dimension_numbers<[1], [0], [0], [1], [0, 0, 1, 1], [], []>} : vector<8x128xf32>, vector<128x128xf32>, vector<8x128xf32> -> vector<8x128xf32>
    %49 = vector.broadcast %47 : vector<1x128xf32> to vector<8x128xf32>
    %50 = arith.addf %48, %49 : vector<8x128xf32>
    %cst_32 = arith.constant 0.00999999977 : f32
    %51 = vector.broadcast %cst_32 : f32 to vector<8x128xf32>
    %52 = arith.mulf %51, %50 : vector<8x128xf32>
    %53 = arith.maximumf %50, %52 : vector<8x128xf32>
    %c0_33 = arith.constant 0 : index
    %c896 = arith.constant 896 : index
    %54 = vector.load %arg3[%c0_33, %c896] : memref<128x1408xf32, #tpu.memory_space<vmem>>, vector<128x128xf32>
    %c0_34 = arith.constant 0 : index
    %c896_35 = arith.constant 896 : index
    %55 = vector.load %arg4[%c0_34, %c896_35] : memref<1x1408xf32, #tpu.memory_space<vmem>>, vector<1x128xf32>
    %cst_36 = arith.constant dense<0.000000e+00> : vector<8x128xf32>
    %56 = tpu.matmul %53, %54, %cst_36 {dimension_numbers = #tpu.dot_dimension_numbers<[1], [0], [0], [1], [0, 0, 1, 1], [], []>} : vector<8x128xf32>, vector<128x128xf32>, vector<8x128xf32> -> vector<8x128xf32>
    %57 = vector.broadcast %55 : vector<1x128xf32> to vector<8x128xf32>
    %58 = arith.addf %56, %57 : vector<8x128xf32>
    %cst_37 = arith.constant 0.00999999977 : f32
    %59 = vector.broadcast %cst_37 : f32 to vector<8x128xf32>
    %60 = arith.mulf %59, %58 : vector<8x128xf32>
    %61 = arith.maximumf %58, %60 : vector<8x128xf32>
    %c0_38 = arith.constant 0 : index
    %c1024 = arith.constant 1024 : index
    %62 = vector.load %arg3[%c0_38, %c1024] : memref<128x1408xf32, #tpu.memory_space<vmem>>, vector<128x128xf32>
    %c0_39 = arith.constant 0 : index
    %c1024_40 = arith.constant 1024 : index
    %63 = vector.load %arg4[%c0_39, %c1024_40] : memref<1x1408xf32, #tpu.memory_space<vmem>>, vector<1x128xf32>
    %cst_41 = arith.constant dense<0.000000e+00> : vector<8x128xf32>
    %64 = tpu.matmul %61, %62, %cst_41 {dimension_numbers = #tpu.dot_dimension_numbers<[1], [0], [0], [1], [0, 0, 1, 1], [], []>} : vector<8x128xf32>, vector<128x128xf32>, vector<8x128xf32> -> vector<8x128xf32>
    %65 = vector.broadcast %63 : vector<1x128xf32> to vector<8x128xf32>
    %66 = arith.addf %64, %65 : vector<8x128xf32>
    %cst_42 = arith.constant 0.00999999977 : f32
    %67 = vector.broadcast %cst_42 : f32 to vector<8x128xf32>
    %68 = arith.mulf %67, %66 : vector<8x128xf32>
    %69 = arith.maximumf %66, %68 : vector<8x128xf32>
    %c0_43 = arith.constant 0 : index
    %c1152 = arith.constant 1152 : index
    %70 = vector.load %arg3[%c0_43, %c1152] : memref<128x1408xf32, #tpu.memory_space<vmem>>, vector<128x128xf32>
    %c0_44 = arith.constant 0 : index
    %c1152_45 = arith.constant 1152 : index
    %71 = vector.load %arg4[%c0_44, %c1152_45] : memref<1x1408xf32, #tpu.memory_space<vmem>>, vector<1x128xf32>
    %cst_46 = arith.constant dense<0.000000e+00> : vector<8x128xf32>
    %72 = tpu.matmul %69, %70, %cst_46 {dimension_numbers = #tpu.dot_dimension_numbers<[1], [0], [0], [1], [0, 0, 1, 1], [], []>} : vector<8x128xf32>, vector<128x128xf32>, vector<8x128xf32> -> vector<8x128xf32>
    %73 = vector.broadcast %71 : vector<1x128xf32> to vector<8x128xf32>
    %74 = arith.addf %72, %73 : vector<8x128xf32>
    %cst_47 = arith.constant 0.00999999977 : f32
    %75 = vector.broadcast %cst_47 : f32 to vector<8x128xf32>
    %76 = arith.mulf %75, %74 : vector<8x128xf32>
    %77 = arith.maximumf %74, %76 : vector<8x128xf32>
    %c0_48 = arith.constant 0 : index
    %c1280 = arith.constant 1280 : index
    %78 = vector.load %arg3[%c0_48, %c1280] : memref<128x1408xf32, #tpu.memory_space<vmem>>, vector<128x128xf32>
    %c0_49 = arith.constant 0 : index
    %c1280_50 = arith.constant 1280 : index
    %79 = vector.load %arg4[%c0_49, %c1280_50] : memref<1x1408xf32, #tpu.memory_space<vmem>>, vector<1x128xf32>
    %cst_51 = arith.constant dense<0.000000e+00> : vector<8x128xf32>
    %80 = tpu.matmul %77, %78, %cst_51 {dimension_numbers = #tpu.dot_dimension_numbers<[1], [0], [0], [1], [0, 0, 1, 1], [], []>} : vector<8x128xf32>, vector<128x128xf32>, vector<8x128xf32> -> vector<8x128xf32>
    %81 = vector.broadcast %79 : vector<1x128xf32> to vector<8x128xf32>
    %82 = arith.addf %80, %81 : vector<8x128xf32>
    %83 = tpu.concatenate %82, %38, %39, %45 in 1 : vector<8x128xf32>, vector<8x128xf32>, vector<8x128xf32>, vector<8x128xf32> -> vector<8x512xf32>
    %c0_52 = arith.constant 0 : index
    %c0_53 = arith.constant 0 : index
    %84 = vector.load %arg5[%c0_52, %c0_53] : memref<8x512xf32, #tpu.memory_space<vmem>>, vector<8x512xf32>
    tpu.vector_store %arg5[%c0_52, %c0_53], %83 {strides = array<i32>} : memref<8x512xf32, #tpu.memory_space<vmem>>, vector<8x512xf32>,
    return
  }
  func.func @transform_0(%arg0: i32) -> (i32, i32) {
    %c0_i32 = arith.constant 0 : i32
    %c0_i32_0 = arith.constant 0 : i32
    return %arg0, %c0_i32 : i32, i32
  }
  func.func @transform_1(%arg0: i32) -> (i32, i32) {
    %c0_i32 = arith.constant 0 : i32
    %c0_i32_0 = arith.constant 0 : i32
    return %arg0, %c0_i32 : i32, i32
  }
  func.func @transform_2(%arg0: i32) -> (i32, i32) {
    %c0_i32 = arith.constant 0 : i32
    %c0_i32_0 = arith.constant 0 : i32
    %c0_i32_1 = arith.constant 0 : i32
    return %c0_i32, %c0_i32_0 : i32, i32
  }
  func.func @transform_3(%arg0: i32) -> (i32, i32) {
    %c0_i32 = arith.constant 0 : i32
    %c0_i32_0 = arith.constant 0 : i32
    %c0_i32_1 = arith.constant 0 : i32
    return %c0_i32, %c0_i32_0 : i32, i32
  }
  func.func @transform_4(%arg0: i32) -> (i32, i32) {
    %c0_i32 = arith.constant 0 : i32
    %c0_i32_0 = arith.constant 0 : i32
    return %arg0, %c0_i32 : i32, i32
  }
}

</mosaic_0001>

<llo_original>
// kernel: tpu_custom_call.1
$region0: #{tpu_custom_call.1}
  #allocation0 [shape = 'u32[]', space=smem, size = 0x4, offset = 0x4, fixed_abs, tag = 'smem constant byte address 0x4 - core index']
  #allocation1 [shape = 'u32[144,128]{1,0:T(1,128)}', space=vmem, size = 0x12000, scoped, tag = 'internal scratch']
  %s0 = inlined_call_operand.hbm [shape: f32[16,128], index: 0, kind: input, shape index: {}]
  %s1 = inlined_call_operand.hbm [shape: f32[16,128], index: 1, kind: input, shape index: {}]
  %s2 = inlined_call_operand.hbm [shape: f32[128,1408], index: 2, kind: input, shape index: {}]
  %s3 = inlined_call_operand.hbm [shape: f32[1,1408], index: 3, kind: input, shape index: {}]
  %s4 = inlined_call_operand.hbm [shape: f32[16,512], index: 4, kind: output, shape index: {}]
  %s5 = sld [smem:[#allocation0]]
  $region65: #{tpu_custom_call.1} parent=0
    _
  %s7 = ssub.s32 1, %s5
  %s8 = scalar_select 0, %s7, %s5
  $region1: #{tpu_custom_call.1} parent=0
    #allocation2 [shape = 'u8[8192]{0}', space=vmem, size = 0x2000, scoped, tag = 'input window, operand 0']
    #allocation3 [shape = 's32[2]{0}', space=sflag, size = 0x8, scoped, tag = 'scoped memory for tpu_custom_call.1']
    #allocation4 [shape = 's32[2]{0}', space=sflag, size = 0x8, scoped, tag = 'scoped memory for tpu_custom_call.1']
    #allocation5 [shape = 'u8[8192]{0}', space=vmem, size = 0x2000, scoped, tag = 'input window, operand 1']
    #allocation6 [shape = 's32[2]{0}', space=sflag, size = 0x8, scoped, tag = 'scoped memory for tpu_custom_call.1']
    #allocation7 [shape = 'u8[720896]{0}', space=vmem, size = 0xb0000, scoped, tag = 'input window, operand 2, single buffered']
    #allocation8 [shape = 'u8[5632]{0}', space=vmem, size = 0x1800, scoped, tag = 'input window, operand 3, single buffered']
    #allocation9 [shape = 's32[1]{0}', space=sflag, size = 0x4, scoped, tag = 'scoped memory for tpu_custom_call.1']
    #allocation10 [shape = 'u8[32768]{0}', space=vmem, size = 0x8000, scoped, tag = 'output window, operand 0']
    %9 = vsyncpa [#allocation3], 0
    %s10 = scalar_lea.sflag [#allocation3], 1
    %11 = vsyncpa %s10, 0
    %12 = vsyncpa [#allocation6], 0
    %s13 = scalar_lea.sflag [#allocation6], 1
    %14 = vsyncpa %s13, 0
    %15 = vsyncpa [#allocation9], 0
    %16 = vsyncpa [#allocation4], 0
    %s17 = scalar_lea.sflag [#allocation4], 1
    %18 = vsyncpa %s17, 0
    loop: start=0, step=1, limit=4
    $region2: #{tpu_custom_call.1} parent=1 // loop_pre_header
      _
    $region3: #{tpu_custom_call.1} parent=1 // loop_header
      %s20 = sphi 0, %s24
      %p21 = scmp.ge.s32.totalorder %s20, 4
      %s30 = sphi 0, %s32
      %s33 = sphi 0, %s30
      %s34 = sphi 0, %s33
      %s50 = sphi 0, %s34
      %s56 = sphi 0, %s58
      %s59 = sphi 0, %s56
      %s60 = sphi 0, %s59
      %s76 = sphi 0, %s60
      %s80 = sphi 0, %s80
      %s82 = sphi 0, %s80
      %s83 = sphi 0, %s82
      %s97 = sphi 0, %s83
      %s101 = sphi 0, %s101
      %s103 = sphi 0, %s101
      %s104 = sphi 0, %s103
      %s118 = sphi 0, %s104
      %s124 = sphi 0, %s126
      %s127 = sphi 0, %s124
      %s128 = sphi 0, %s127
      %s144 = sphi 0, %s128
    $region4: #{tpu_custom_call.1} parent=1 // loop_header_branch
      %23 = sbr.rel (%p21) target = $region8
    $region5: #{tpu_custom_call.1} parent=1 // loop_body
      %s25 = ssub.s32 %s20, 1
      %s26 = ssub.s32 %s20, 2
      %s27 = sadd.s32 %s20, 1
      %s28 = ssub.s32 %s20, %s27
      %p29 = scmp.eq.s32.totalorder %s28, 0
      %s31 = sadd.s32 %s30, 1
      %s32 = scalar_select %p29, %s30, %s31
      %p35 = pneg %p29
      %p36 = scmp.eq.s32.totalorder %s20, 1
      %p37 = por %p35, %p36
      %p38 = scmp.ne.s32.totalorder %s30, %s33
      %p39 = scmp.eq.s32.totalorder %s20, 0
      %p40 = por %p38, %p39
      %p41 = scmp.ne.s32.totalorder %s30, %s33
      %p42 = scmp.eq.s32.totalorder %s25, 1
      %p43 = por %p41, %p42
      %p44 = scmp.ne.s32.totalorder %s33, %s34
      %p45 = scmp.eq.s32.totalorder %s25, 0
      %p46 = por %p44, %p45
      %p47 = scmp.ne.s32.totalorder %s33, %s34
      %p48 = scmp.eq.s32.totalorder %s26, 1
      %p49 = por %p47, %p48
      %p51 = scmp.ne.s32.totalorder %s34, %s50
      %p52 = scmp.eq.s32.totalorder %s26, 0
      %p53 = por %p51, %p52
      %s54 = ssub.s32 %s20, %s27
      %p55 = scmp.eq.s32.totalorder %s54, 0
      %s57 = sadd.s32 %s56, 1
      %s58 = scalar_select %p55, %s56, %s57
      %p61 = pneg %p55
      %p62 = scmp.eq.s32.totalorder %s20, 1
      %p63 = por %p61, %p62
      %p64 = scmp.ne.s32.totalorder %s56, %s59
      %p65 = scmp.eq.s32.totalorder %s20, 0
      %p66 = por %p64, %p65
      %p67 = scmp.ne.s32.totalorder %s56, %s59
      %p68 = scmp.eq.s32.totalorder %s25, 1
      %p69 = por %p67, %p68
      %p70 = scmp.ne.s32.totalorder %s59, %s60
      %p71 = scmp.eq.s32.totalorder %s25, 0
      %p72 = por %p70, %p71
      %p73 = scmp.ne.s32.totalorder %s59, %s60
      %p74 = scmp.eq.s32.totalorder %s26, 1
      %p75 = por %p73, %p74
      %p77 = scmp.ne.s32.totalorder %s60, %s76
      %p78 = scmp.eq.s32.totalorder %s26, 0
      %p79 = por %p77, %p78
      %s81 = sadd.s32 %s80, 1
      %p84 = scmp.eq.s32.totalorder %s20, 1
      %p85 = scmp.ne.s32.totalorder %s80, %s82
      %p86 = scmp.eq.s32.totalorder %s20, 0
      %p87 = por %p85, %p86
      %p88 = scmp.ne.s32.totalorder %s80, %s82
      %p89 = scmp.eq.s32.totalorder %s25, 1
      %p90 = por %p88, %p89
      %p91 = scmp.ne.s32.totalorder %s82, %s83
      %p92 = scmp.eq.s32.totalorder %s25, 0
      %p93 = por %p91, %p92
      %p94 = scmp.ne.s32.totalorder %s82, %s83
      %p95 = scmp.eq.s32.totalorder %s26, 1
      %p96 = por %p94, %p95
      %p98 = scmp.ne.s32.totalorder %s83, %s97
      %p99 = scmp.eq.s32.totalorder %s26, 0
      %p100 = por %p98, %p99
      %s102 = sadd.s32 %s101, 1
      %p105 = scmp.eq.s32.totalorder %s20, 1
      %p106 = scmp.ne.s32.totalorder %s101, %s103
      %p107 = scmp.eq.s32.totalorder %s20, 0
      %p108 = por %p106, %p107
      %p109 = scmp.ne.s32.totalorder %s101, %s103
      %p110 = scmp.eq.s32.totalorder %s25, 1
      %p111 = por %p109, %p110
      %p112 = scmp.ne.s32.totalorder %s103, %s104
      %p113 = scmp.eq.s32.totalorder %s25, 0
      %p114 = por %p112, %p113
      %p115 = scmp.ne.s32.totalorder %s103, %s104
      %p116 = scmp.eq.s32.totalorder %s26, 1
      %p117 = por %p115, %p116
      %p119 = scmp.ne.s32.totalorder %s104, %s118
      %p120 = scmp.eq.s32.totalorder %s26, 0
      %p121 = por %p119, %p120
      %s122 = ssub.s32 %s20, %s27
      %p123 = scmp.eq.s32.totalorder %s122, 0
      %s125 = sadd.s32 %s124, 1
      %s126 = scalar_select %p123, %s124, %s125
      %p129 = pneg %p123
      %p130 = scmp.eq.s32.totalorder %s20, 1
      %p131 = por %p129, %p130
      %p132 = scmp.ne.s32.totalorder %s124, %s127
      %p133 = scmp.eq.s32.totalorder %s20, 0
      %p134 = por %p132, %p133
      %p135 = scmp.ne.s32.totalorder %s124, %s127
      %p136 = scmp.eq.s32.totalorder %s25, 1
      %p137 = por %p135, %p136
      %p138 = scmp.ne.s32.totalorder %s127, %s128
      %p139 = scmp.eq.s32.totalorder %s25, 0
      %p140 = por %p138, %p139
      %p141 = scmp.ne.s32.totalorder %s127, %s128
      %p142 = scmp.eq.s32.totalorder %s26, 1
      %p143 = por %p141, %p142
      %p145 = scmp.ne.s32.totalorder %s128, %s144
      %p146 = scmp.eq.s32.totalorder %s26, 0
      %p147 = por %p145, %p146
      %p148 = scmp.le.s32.totalorder 1, %s20
      %p149 = scmp.lt.s32.totalorder %s20, 3
      %p150 = pnand %p148, %p149
      %p151 = pneg %p150
      // Predicated region
      $region9: #{tpu_custom_call.1} parent=5 // pred_check
        _
      $region10: #{tpu_custom_call.1} parent=5 // pred_check_branch
        %153 = sbr.rel (%p150) target = $region12
      $region11: #{tpu_custom_call.1} parent=5 // pred_region
        %s154 = ssub.s32 %s20, 1
        // Predicated region
        $region13: #{tpu_custom_call.1} parent=11 // pred_check
          %p155 = pneg %p93
        $region14: #{tpu_custom_call.1} parent=11 // pred_check_branch
          %157 = sbr.rel (%p155) target = $region16
        $region15: #{tpu_custom_call.1} parent=11 // pred_region
          %s159 = ssub.s32 22528, 22528
          %160 = vsyncadd [#allocation6], %s159
          %s161 = sshll.u32 [#allocation7], 4
          %s162 = int_to_ptr.vmem [resolvable:$true] %s161
          %167 = dma.hbm_to_vmem [thread:$0]  %s2, 22528, %s162, [#allocation6], 1408, 1408, 88
        $region16: #{tpu_custom_call.1} parent=11 // pred_fallthru
          _
        // Predicated region
        $region17: #{tpu_custom_call.1} parent=11 // pred_check
          %p168 = pneg %p114
        $region18: #{tpu_custom_call.1} parent=11 // pred_check_branch
          %170 = sbr.rel (%p168) target = $region20
        $region19: #{tpu_custom_call.1} parent=11 // pred_region
          %s172 = ssub.s32 176, 176
          %173 = vsyncadd [#allocation9], %s172
          %s175 = sshll.u32 [#allocation8], 4
          %s176 = int_to_ptr.vmem [resolvable:$true] %s175
          %178 = dma.hbm_to_vmem [thread:$0]  %s3, 176, %s176, [#allocation9]
        $region20: #{tpu_custom_call.1} parent=11 // pred_fallthru
          _
      $region12: #{tpu_custom_call.1} parent=5 // pred_fallthru
        _
      %p179 = scmp.lt.s32.totalorder %s20, 2
      // Predicated region
      $region21: #{tpu_custom_call.1} parent=5 // pred_check
        %p180 = pneg %p179
      $region22: #{tpu_custom_call.1} parent=5 // pred_check_branch
        %182 = sbr.rel (%p180) target = $region24
      $region23: #{tpu_custom_call.1} parent=5 // pred_region
        // Predicated region
        $region25: #{tpu_custom_call.1} parent=23 // pred_check
          %p183 = pneg %p40
        $region26: #{tpu_custom_call.1} parent=23 // pred_check_branch
          %185 = sbr.rel (%p183) target = $region28
        $region27: #{tpu_custom_call.1} parent=23 // pred_region
          %s186 = sand.u32 %s30, 1
          %s187 = scalar_lea.sflag [#allocation3], %s186
          %s188 = sand.u32 %s30, 1
          %s189 = smul.addr %s188, 8
          %s190 = scalar_lea.vmem [#allocation2], %s189
          %s192 = ssub.s32 128, 128
          %193 = vsyncadd %s187, %s192
          %s194 = smul.addr %s20, 128
          %s195 = scalar_lea.hbm %s0, %s194
          %s197 = sshll.u32 %s190, 4
          %s198 = int_to_ptr.vmem [resolvable:$true] %s197
          %200 = dma.hbm_to_vmem [thread:$0]  %s195, 128, %s198, %s187
        $region28: #{tpu_custom_call.1} parent=23 // pred_fallthru
          _
        // Predicated region
        $region29: #{tpu_custom_call.1} parent=23 // pred_check
          %p201 = pneg %p66
        $region30: #{tpu_custom_call.1} parent=23 // pred_check_branch
          %203 = sbr.rel (%p201) target = $region32
        $region31: #{tpu_custom_call.1} parent=23 // pred_region
          %s204 = sand.u32 %s20, 1
          %s205 = scalar_lea.sflag [#allocation6], %s204
          %s206 = sand.u32 %s56, 1
          %s207 = smul.addr %s206, 8
          %s208 = scalar_lea.vmem [#allocation5], %s207
          %s210 = ssub.s32 128, 128
          %211 = vsyncadd %s205, %s210
          %s212 = smul.addr %s20, 128
          %s213 = scalar_lea.hbm %s1, %s212
          %s215 = sshll.u32 %s208, 4
          %s216 = int_to_ptr.vmem [resolvable:$true] %s215
          %218 = dma.hbm_to_vmem [thread:$0]  %s213, 128, %s216, %s205
        $region32: #{tpu_custom_call.1} parent=23 // pred_fallthru
          _
      $region24: #{tpu_custom_call.1} parent=5 // pred_fallthru
        _
      %p219 = scmp.le.s32.totalorder 1, %s20
      %p220 = scmp.lt.s32.totalorder %s20, 3
      %p221 = pnand %p219, %p220
      %p222 = pneg %p221
      // Predicated region
      $region33: #{tpu_custom_call.1} parent=5 // pred_check
        _
      $region34: #{tpu_custom_call.1} parent=5 // pred_check_branch
        %224 = sbr.rel (%p221) target = $region36
      $region35: #{tpu_custom_call.1} parent=5 // pred_region
        %s225 = ssub.s32 %s20, 1
        %s226 = sand.u32 %s33, 1
        %s227 = scalar_lea.sflag [#allocation3], %s226
        %s228 = sand.u32 %s33, 1
        %s229 = smul.addr %s228, 8
        %s230 = scalar_lea.vmem [#allocation2], %s229
        // Predicated region
        $region37: #{tpu_custom_call.1} parent=35 // pred_check
          %p231 = pneg %p46
        $region38: #{tpu_custom_call.1} parent=35 // pred_check_branch
          %233 = sbr.rel (%p231) target = $region40
        $region39: #{tpu_custom_call.1} parent=35 // pred_region
          %234 = dma.done %s227, 128
        $region40: #{tpu_custom_call.1} parent=35 // pred_fallthru
          _
        %s235 = sand.u32 %s25, 1
        %s236 = scalar_lea.sflag [#allocation6], %s235
        %s237 = sand.u32 %s59, 1
        %s238 = smul.addr %s237, 8
        %s239 = scalar_lea.vmem [#allocation5], %s238
        // Predicated region
        $region41: #{tpu_custom_call.1} parent=35 // pred_check
          %p240 = pneg %p72
        $region42: #{tpu_custom_call.1} parent=35 // pred_check_branch
          %242 = sbr.rel (%p240) target = $region44
        $region43: #{tpu_custom_call.1} parent=35 // pred_region
          %243 = dma.done %s236, 128
        $region44: #{tpu_custom_call.1} parent=35 // pred_fallthru
          _
        // Predicated region
        $region45: #{tpu_custom_call.1} parent=35 // pred_check
          %p244 = pneg %p93
        $region46: #{tpu_custom_call.1} parent=35 // pred_check_branch
          %246 = sbr.rel (%p244) target = $region48
        $region47: #{tpu_custom_call.1} parent=35 // pred_region
          %247 = dma.done [#allocation6], 22528
        $region48: #{tpu_custom_call.1} parent=35 // pred_fallthru
          _
        // Predicated region
        $region49: #{tpu_custom_call.1} parent=35 // pred_check
          %p248 = pneg %p114
        $region50: #{tpu_custom_call.1} parent=35 // pred_check_branch
          %250 = sbr.rel (%p248) target = $region52
        $region51: #{tpu_custom_call.1} parent=35 // pred_region
          %251 = dma.done [#allocation9], 176
        $region52: #{tpu_custom_call.1} parent=35 // pred_fallthru
          _
        %s252 = sand.u32 %s33, 1
        %s253 = scalar_lea.sflag [#allocation3], %s252
        %s254 = sand.u32 %s33, 1
        %s255 = smul.addr %s254, 8
        %s256 = scalar_lea.vmem [#allocation2], %s255
        %p257 = pneg %p46
        %p258 = pneg %p43
        %s259 = sand.u32 %s25, 1
        %s260 = scalar_lea.sflag [#allocation6], %s259
        %s261 = sand.u32 %s59, 1
        %s262 = smul.addr %s261, 8
        %s263 = scalar_lea.vmem [#allocation5], %s262
        %p264 = pneg %p72
        %p265 = pneg %p69
        %p266 = pneg %p93
        %p267 = pneg %p90
        %p268 = pneg %p114
        %p269 = pneg %p111
        %p270 = pneg %p140
        %p271 = pneg %p137
        %s272 = sand.u32 %s127, 1
        %s273 = scalar_lea.sflag [#allocation4], %s272
        %s274 = sand.u32 %s127, 1
        %s275 = smul.addr %s274, 32
        %s276 = scalar_lea.vmem [#allocation10], %s275
        %v277 = vld [vmem:[%s230] sm:$0xff]
        %v278 = vld [vmem:[#allocation7] sm:$0xff]
        %v279 = vld [vmem:[#allocation7 + $0x58] sm:$0xff]
        %v280 = vld [vmem:[#allocation7 + $0xb0] sm:$0xff]
        %v281 = vld [vmem:[#allocation7 + $0x108] sm:$0xff]
        %v282 = vld [vmem:[#allocation7 + $0x160] sm:$0xff]
        %v283 = vld [vmem:[#allocation7 + $0x1b8] sm:$0xff]
        %v284 = vld [vmem:[#allocation7 + $0x210] sm:$0xff]
        %v285 = vld [vmem:[#allocation7 + $0x268] sm:$0xff]
        %v286 = vld [vmem:[#allocation7 + $0x2c0] sm:$0xff]
        %v287 = vld [vmem:[#allocation7 + $0x318] sm:$0xff]
        %v288 = vld [vmem:[#allocation7 + $0x370] sm:$0xff]
        %v289 = vld [vmem:[#allocation7 + $0x3c8] sm:$0xff]
        %v290 = vld [vmem:[#allocation7 + $0x420] sm:$0xff]
        %v291 = vld [vmem:[#allocation7 + $0x478] sm:$0xff]
        %v292 = vld [vmem:[#allocation7 + $0x4d0] sm:$0xff]
        %v293 = vld [vmem:[#allocation7 + $0x528] sm:$0xff]
        %v294 = vld [vmem:[#allocation8] sm:$0x1]
        %v296 = vlaneseq
        %v297 = vshrl.u32 %v296, 7
        %v298 = vsub.s32 0, %v297
        %v299 = vrot.slane %v294, %v298
        %301 = vmatprep.subr.mxu0 0.0
        %302 = vmatpush1.msra.mxu0 %v293
        %303 = vmatprep.subr.mxu0 0.0
        %304 = vmatpush1.msra.mxu0 %v292
        %305 = vmatprep.subr.mxu0 0.0
        %306 = vmatpush1.msra.mxu0 %v291
        %307 = vmatprep.subr.mxu0 0.0
        %308 = vmatpush1.msra.mxu0 %v290
        %309 = vmatprep.subr.mxu0 0.0
        %310 = vmatpush1.msra.mxu0 %v289
        %311 = vmatprep.subr.mxu0 0.0
        %312 = vmatpush1.msra.mxu0 %v288
        %313 = vmatprep.subr.mxu0 0.0
        %314 = vmatpush1.msra.mxu0 %v287
        %315 = vmatprep.subr.mxu0 0.0
        %316 = vmatpush1.msra.mxu0 %v286
        %317 = vmatprep.subr.mxu0 0.0
        %318 = vmatpush1.msra.mxu0 %v285
        %319 = vmatprep.subr.mxu0 0.0
        %320 = vmatpush1.msra.mxu0 %v284
        %321 = vmatprep.subr.mxu0 0.0
        %322 = vmatpush1.msra.mxu0 %v283
        %323 = vmatprep.subr.mxu0 0.0
        %324 = vmatpush1.msra.mxu0 %v282
        %325 = vmatprep.subr.mxu0 0.0
        %326 = vmatpush1.msra.mxu0 %v281
        %327 = vmatprep.subr.mxu0 0.0
        %328 = vmatpush1.msra.mxu0 %v280
        %329 = vmatprep.subr.mxu0 0.0
        %330 = vmatpush1.msra.mxu0 %v279
        %331 = vmatprep.subr.mxu0 0.0
        %332 = vmatpush1.msra.mxu0 %v278
        %333 = vmatprep.subr.mxu0 0.0
        %334 = vmatpush2.msra.mxu0 0.0
        %335 = vmatprep.subr.mxu0 0.0
        %336 = vmatpush2.msra.mxu0 0.0
        %337 = vmatprep.subr.mxu0 0.0
        %338 = vmatpush2.msra.mxu0 0.0
        %339 = vmatprep.subr.mxu0 0.0
        %340 = vmatpush2.msra.mxu0 0.0
        %341 = vmatprep.subr.mxu0 0.0
        %342 = vmatpush2.msra.mxu0 0.0
        %343 = vmatprep.subr.mxu0 0.0
        %344 = vmatpush2.msra.mxu0 0.0
        %345 = vmatprep.subr.mxu0 0.0
        %346 = vmatpush2.msra.mxu0 0.0
        %347 = vmatprep.subr.mxu0 0.0
        %348 = vmatpush2.msra.mxu0 0.0
        %349 = vmatprep.subr.mxu0 0.0
        %350 = vmatpush2.msra.mxu0 0.0
        %351 = vmatprep.subr.mxu0 0.0
        %352 = vmatpush2.msra.mxu0 0.0
        %353 = vmatprep.subr.mxu0 0.0
        %354 = vmatpush2.msra.mxu0 0.0
        %355 = vmatprep.subr.mxu0 0.0
        %356 = vmatpush2.msra.mxu0 0.0
        %357 = vmatprep.subr.mxu0 0.0
        %358 = vmatpush2.msra.mxu0 0.0
        %359 = vmatprep.subr.mxu0 0.0
        %360 = vmatpush2.msra.mxu0 0.0
        %361 = vmatprep.subr.mxu0 0.0
        %362 = vmatpush2.msra.mxu0 0.0
        %363 = vmatprep.subr.mxu0 0.0
        %364 = vmatpush2.msra.mxu0 0.0
        %365 = vmatprep.mubr.f32.mxu0 0.0
        %366 = vmatmul.mubr.f32.gmra.mxu0 %v277
        %v367 = vpop.f32.mrf.mxu0
        %v368 = vadd.f32 %v299, %v367
        %v369 = vpop.f32.mrf.mxu0
        %370 = vdwg.mxu0
        %v371 = vmul.f32 %v368, 0.01
        %v372 = vmax.f32 %v368, %v371
        %v373 = vld [vmem:[#allocation7 + $0x8] sm:$0xff]
        %v374 = vld [vmem:[#allocation7 + $0x60] sm:$0xff]
        %v375 = vld [vmem:[#allocation7 + $0xb8] sm:$0xff]
        %v376 = vld [vmem:[#allocation7 + $0x110] sm:$0xff]
        %v377 = vld [vmem:[#allocation7 + $0x168] sm:$0xff]
        %v378 = vld [vmem:[#allocation7 + $0x1c0] sm:$0xff]
        %v379 = vld [vmem:[#allocation7 + $0x218] sm:$0xff]
        %v380 = vld [vmem:[#allocation7 + $0x270] sm:$0xff]
        %v381 = vld [vmem:[#allocation7 + $0x2c8] sm:$0xff]
        %v382 = vld [vmem:[#allocation7 + $0x320] sm:$0xff]
        %v383 = vld [vmem:[#allocation7 + $0x378] sm:$0xff]
        %v384 = vld [vmem:[#allocation7 + $0x3d0] sm:$0xff]
        %v385 = vld [vmem:[#allocation7 + $0x428] sm:$0xff]
        %v386 = vld [vmem:[#allocation7 + $0x480] sm:$0xff]
        %v387 = vld [vmem:[#allocation7 + $0x4d8] sm:$0xff]
        %v388 = vld [vmem:[#allocation7 + $0x530] sm:$0xff]
        %v389 = vld [vmem:[#allocation8 + $0x1] sm:$0x1]
        %v391 = vlaneseq
        %v392 = vshrl.u32 %v391, 7
        %v393 = vsub.s32 0, %v392
        %v394 = vrot.slane %v389, %v393
        %396 = vmatprep.subr.mxu0 0.0
        %397 = vmatpush1.msra.mxu0 %v388
        %398 = vmatprep.subr.mxu0 0.0
        %399 = vmatpush1.msra.mxu0 %v387
        %400 = vmatprep.subr.mxu0 0.0
        %401 = vmatpush1.msra.mxu0 %v386
        %402 = vmatprep.subr.mxu0 0.0
        %403 = vmatpush1.msra.mxu0 %v385
        %404 = vmatprep.subr.mxu0 0.0
        %405 = vmatpush1.msra.mxu0 %v384
        %406 = vmatprep.subr.mxu0 0.0
        %407 = vmatpush1.msra.mxu0 %v383
        %408 = vmatprep.subr.mxu0 0.0
        %409 = vmatpush1.msra.mxu0 %v382
        %410 = vmatprep.subr.mxu0 0.0
        %411 = vmatpush1.msra.mxu0 %v381
        %412 = vmatprep.subr.mxu0 0.0
        %413 = vmatpush1.msra.mxu0 %v380
        %414 = vmatprep.subr.mxu0 0.0
        %415 = vmatpush1.msra.mxu0 %v379
        %416 = vmatprep.subr.mxu0 0.0
        %417 = vmatpush1.msra.mxu0 %v378
        %418 = vmatprep.subr.mxu0 0.0
        %419 = vmatpush1.msra.mxu0 %v377
        %420 = vmatprep.subr.mxu0 0.0
        %421 = vmatpush1.msra.mxu0 %v376
        %422 = vmatprep.subr.mxu0 0.0
        %423 = vmatpush1.msra.mxu0 %v375
        %424 = vmatprep.subr.mxu0 0.0
        %425 = vmatpush1.msra.mxu0 %v374
        %426 = vmatprep.subr.mxu0 0.0
        %427 = vmatpush1.msra.mxu0 %v373
        %428 = vmatprep.subr.mxu0 0.0
        %429 = vmatpush2.msra.mxu0 0.0
        %430 = vmatprep.subr.mxu0 0.0
        %431 = vmatpush2.msra.mxu0 0.0
        %432 = vmatprep.subr.mxu0 0.0
        %433 = vmatpush2.msra.mxu0 0.0
        %434 = vmatprep.subr.mxu0 0.0
        %435 = vmatpush2.msra.mxu0 0.0
        %436 = vmatprep.subr.mxu0 0.0
        %437 = vmatpush2.msra.mxu0 0.0
        %438 = vmatprep.subr.mxu0 0.0
        %439 = vmatpush2.msra.mxu0 0.0
        %440 = vmatprep.subr.mxu0 0.0
        %441 = vmatpush2.msra.mxu0 0.0
        %442 = vmatprep.subr.mxu0 0.0
        %443 = vmatpush2.msra.mxu0 0.0
        %444 = vmatprep.subr.mxu0 0.0
        %445 = vmatpush2.msra.mxu0 0.0
        %446 = vmatprep.subr.mxu0 0.0
        %447 = vmatpush2.msra.mxu0 0.0
        %448 = vmatprep.subr.mxu0 0.0
        %449 = vmatpush2.msra.mxu0 0.0
        %450 = vmatprep.subr.mxu0 0.0
        %451 = vmatpush2.msra.mxu0 0.0
        %452 = vmatprep.subr.mxu0 0.0
        %453 = vmatpush2.msra.mxu0 0.0
        %454 = vmatprep.subr.mxu0 0.0
        %455 = vmatpush2.msra.mxu0 0.0
        %456 = vmatprep.subr.mxu0 0.0
        %457 = vmatpush2.msra.mxu0 0.0
        %458 = vmatprep.subr.mxu0 0.0
        %459 = vmatpush2.msra.mxu0 0.0
        %460 = vmatprep.mubr.f32.mxu0 0.0
        %461 = vmatmul.mubr.f32.gmra.mxu0 %v372
        %v462 = vpop.f32.mrf.mxu0
        %v463 = vadd.f32 %v394, %v462
        %v464 = vpop.f32.mrf.mxu0
        %465 = vdwg.mxu0
        %v466 = vmul.f32 %v463, 0.01
        %v467 = vmax.f32 %v463, %v466
        %v468 = vld [vmem:[#allocation7 + $0x10] sm:$0xff]
        %v469 = vld [vmem:[#allocation7 + $0x68] sm:$0xff]
        %v470 = vld [vmem:[#allocation7 + $0xc0] sm:$0xff]
        %v471 = vld [vmem:[#allocation7 + $0x118] sm:$0xff]
        %v472 = vld [vmem:[#allocation7 + $0x170] sm:$0xff]
        %v473 = vld [vmem:[#allocation7 + $0x1c8] sm:$0xff]
        %v474 = vld [vmem:[#allocation7 + $0x220] sm:$0xff]
        %v475 = vld [vmem:[#allocation7 + $0x278] sm:$0xff]
        %v476 = vld [vmem:[#allocation7 + $0x2d0] sm:$0xff]
        %v477 = vld [vmem:[#allocation7 + $0x328] sm:$0xff]
        %v478 = vld [vmem:[#allocation7 + $0x380] sm:$0xff]
        %v479 = vld [vmem:[#allocation7 + $0x3d8] sm:$0xff]
        %v480 = vld [vmem:[#allocation7 + $0x430] sm:$0xff]
        %v481 = vld [vmem:[#allocation7 + $0x488] sm:$0xff]
        %v482 = vld [vmem:[#allocation7 + $0x4e0] sm:$0xff]
        %v483 = vld [vmem:[#allocation7 + $0x538] sm:$0xff]
        %v484 = vld [vmem:[#allocation8 + $0x2] sm:$0x1]
        %v486 = vlaneseq
        %v487 = vshrl.u32 %v486, 7
        %v488 = vsub.s32 0, %v487
        %v489 = vrot.slane %v484, %v488
        %491 = vmatprep.subr.mxu0 0.0
        %492 = vmatpush1.msra.mxu0 %v483
        %493 = vmatprep.subr.mxu0 0.0
        %494 = vmatpush1.msra.mxu0 %v482
        %495 = vmatprep.subr.mxu0 0.0
        %496 = vmatpush1.msra.mxu0 %v481
        %497 = vmatprep.subr.mxu0 0.0
        %498 = vmatpush1.msra.mxu0 %v480
        %499 = vmatprep.subr.mxu0 0.0
        %500 = vmatpush1.msra.mxu0 %v479
        %501 = vmatprep.subr.mxu0 0.0
        %502 = vmatpush1.msra.mxu0 %v478
        %503 = vmatprep.subr.mxu0 0.0
        %504 = vmatpush1.msra.mxu0 %v477
        %505 = vmatprep.subr.mxu0 0.0
        %506 = vmatpush1.msra.mxu0 %v476
        %507 = vmatprep.subr.mxu0 0.0
        %508 = vmatpush1.msra.mxu0 %v475
        %509 = vmatprep.subr.mxu0 0.0
        %510 = vmatpush1.msra.mxu0 %v474
        %511 = vmatprep.subr.mxu0 0.0
        %512 = vmatpush1.msra.mxu0 %v473
        %513 = vmatprep.subr.mxu0 0.0
        %514 = vmatpush1.msra.mxu0 %v472
        %515 = vmatprep.subr.mxu0 0.0
        %516 = vmatpush1.msra.mxu0 %v471
        %517 = vmatprep.subr.mxu0 0.0
        %518 = vmatpush1.msra.mxu0 %v470
        %519 = vmatprep.subr.mxu0 0.0
        %520 = vmatpush1.msra.mxu0 %v469
        %521 = vmatprep.subr.mxu0 0.0
        %522 = vmatpush1.msra.mxu0 %v468
        %523 = vmatprep.subr.mxu0 0.0
        %524 = vmatpush2.msra.mxu0 0.0
        %525 = vmatprep.subr.mxu0 0.0
        %526 = vmatpush2.msra.mxu0 0.0
        %527 = vmatprep.subr.mxu0 0.0
        %528 = vmatpush2.msra.mxu0 0.0
        %529 = vmatprep.subr.mxu0 0.0
        %530 = vmatpush2.msra.mxu0 0.0
        %531 = vmatprep.subr.mxu0 0.0
        %532 = vmatpush2.msra.mxu0 0.0
        %533 = vmatprep.subr.mxu0 0.0
        %534 = vmatpush2.msra.mxu0 0.0
        %535 = vmatprep.subr.mxu0 0.0
        %536 = vmatpush2.msra.mxu0 0.0
        %537 = vmatprep.subr.mxu0 0.0
        %538 = vmatpush2.msra.mxu0 0.0
        %539 = vmatprep.subr.mxu0 0.0
        %540 = vmatpush2.msra.mxu0 0.0
        %541 = vmatprep.subr.mxu0 0.0
        %542 = vmatpush2.msra.mxu0 0.0
        %543 = vmatprep.subr.mxu0 0.0
        %544 = vmatpush2.msra.mxu0 0.0
        %545 = vmatprep.subr.mxu0 0.0
        %546 = vmatpush2.msra.mxu0 0.0
        %547 = vmatprep.subr.mxu0 0.0
        %548 = vmatpush2.msra.mxu0 0.0
        %549 = vmatprep.subr.mxu0 0.0
        %550 = vmatpush2.msra.mxu0 0.0
        %551 = vmatprep.subr.mxu0 0.0
        %552 = vmatpush2.msra.mxu0 0.0
        %553 = vmatprep.subr.mxu0 0.0
        %554 = vmatpush2.msra.mxu0 0.0
        %555 = vmatprep.mubr.f32.mxu0 0.0
        %556 = vmatmul.mubr.f32.gmra.mxu0 %v467
        %v557 = vpop.f32.mrf.mxu0
        %v558 = vadd.f32 %v489, %v557
        %v559 = vpop.f32.mrf.mxu0
        %560 = vdwg.mxu0
        %v561 = vmul.f32 %v558, 0.01
        %v562 = vmax.f32 %v558, %v561
        %v563 = vld [vmem:[#allocation7 + $0x18] sm:$0xff]
        %v564 = vld [vmem:[#allocation7 + $0x70] sm:$0xff]
        %v565 = vld [vmem:[#allocation7 + $0xc8] sm:$0xff]
        %v566 = vld [vmem:[#allocation7 + $0x120] sm:$0xff]
        %v567 = vld [vmem:[#allocation7 + $0x178] sm:$0xff]
        %v568 = vld [vmem:[#allocation7 + $0x1d0] sm:$0xff]
        %v569 = vld [vmem:[#allocation7 + $0x228] sm:$0xff]
        %v570 = vld [vmem:[#allocation7 + $0x280] sm:$0xff]
        %v571 = vld [vmem:[#allocation7 + $0x2d8] sm:$0xff]
        %v572 = vld [vmem:[#allocation7 + $0x330] sm:$0xff]
        %v573 = vld [vmem:[#allocation7 + $0x388] sm:$0xff]
        %v574 = vld [vmem:[#allocation7 + $0x3e0] sm:$0xff]
        %v575 = vld [vmem:[#allocation7 + $0x438] sm:$0xff]
        %v576 = vld [vmem:[#allocation7 + $0x490] sm:$0xff]
        %v577 = vld [vmem:[#allocation7 + $0x4e8] sm:$0xff]
        %v578 = vld [vmem:[#allocation7 + $0x540] sm:$0xff]
        %v579 = vld [vmem:[#allocation8 + $0x3] sm:$0x1]
        %v581 = vlaneseq
        %v582 = vshrl.u32 %v581, 7
        %v583 = vsub.s32 0, %v582
        %v584 = vrot.slane %v579, %v583
        %586 = vmatprep.subr.mxu0 0.0
        %587 = vmatpush1.msra.mxu0 %v578
        %588 = vmatprep.subr.mxu0 0.0
        %589 = vmatpush1.msra.mxu0 %v577
        %590 = vmatprep.subr.mxu0 0.0
        %591 = vmatpush1.msra.mxu0 %v576
        %592 = vmatprep.subr.mxu0 0.0
        %593 = vmatpush1.msra.mxu0 %v575
        %594 = vmatprep.subr.mxu0 0.0
        %595 = vmatpush1.msra.mxu0 %v574
        %596 = vmatprep.subr.mxu0 0.0
        %597 = vmatpush1.msra.mxu0 %v573
        %598 = vmatprep.subr.mxu0 0.0
        %599 = vmatpush1.msra.mxu0 %v572
        %600 = vmatprep.subr.mxu0 0.0
        %601 = vmatpush1.msra.mxu0 %v571
        %602 = vmatprep.subr.mxu0 0.0
        %603 = vmatpush1.msra.mxu0 %v570
        %604 = vmatprep.subr.mxu0 0.0
        %605 = vmatpush1.msra.mxu0 %v569
        %606 = vmatprep.subr.mxu0 0.0
        %607 = vmatpush1.msra.mxu0 %v568
        %608 = vmatprep.subr.mxu0 0.0
        %609 = vmatpush1.msra.mxu0 %v567
        %610 = vmatprep.subr.mxu0 0.0
        %611 = vmatpush1.msra.mxu0 %v566
        %612 = vmatprep.subr.mxu0 0.0
        %613 = vmatpush1.msra.mxu0 %v565
        %614 = vmatprep.subr.mxu0 0.0
        %615 = vmatpush1.msra.mxu0 %v564
        %616 = vmatprep.subr.mxu0 0.0
        %617 = vmatpush1.msra.mxu0 %v563
        %618 = vmatprep.subr.mxu0 0.0
        %619 = vmatpush2.msra.mxu0 0.0
        %620 = vmatprep.subr.mxu0 0.0
        %621 = vmatpush2.msra.mxu0 0.0
        %622 = vmatprep.subr.mxu0 0.0
        %623 = vmatpush2.msra.mxu0 0.0
        %624 = vmatprep.subr.mxu0 0.0
        %625 = vmatpush2.msra.mxu0 0.0
        %626 = vmatprep.subr.mxu0 0.0
        %627 = vmatpush2.msra.mxu0 0.0
        %628 = vmatprep.subr.mxu0 0.0
        %629 = vmatpush2.msra.mxu0 0.0
        %630 = vmatprep.subr.mxu0 0.0
        %631 = vmatpush2.msra.mxu0 0.0
        %632 = vmatprep.subr.mxu0 0.0
        %633 = vmatpush2.msra.mxu0 0.0
        %634 = vmatprep.subr.mxu0 0.0
        %635 = vmatpush2.msra.mxu0 0.0
        %636 = vmatprep.subr.mxu0 0.0
        %637 = vmatpush2.msra.mxu0 0.0
        %638 = vmatprep.subr.mxu0 0.0
        %639 = vmatpush2.msra.mxu0 0.0
        %640 = vmatprep.subr.mxu0 0.0
        %641 = vmatpush2.msra.mxu0 0.0
        %642 = vmatprep.subr.mxu0 0.0
        %643 = vmatpush2.msra.mxu0 0.0
        %644 = vmatprep.subr.mxu0 0.0
        %645 = vmatpush2.msra.mxu0 0.0
        %646 = vmatprep.subr.mxu0 0.0
        %647 = vmatpush2.msra.mxu0 0.0
        %648 = vmatprep.subr.mxu0 0.0
        %649 = vmatpush2.msra.mxu0 0.0
        %650 = vmatprep.mubr.f32.mxu0 0.0
        %651 = vmatmul.mubr.f32.gmra.mxu0 %v562
        %v652 = vpop.f32.mrf.mxu0
        %v653 = vadd.f32 %v584, %v652
        %v654 = vpop.f32.mrf.mxu0
        %655 = vdwg.mxu0
        %v656 = vmul.f32 %v653, 0.01
        %v657 = vmax.f32 %v653, %v656
        %v658 = vld [vmem:[#allocation7 + $0x20] sm:$0xff]
        %v659 = vld [vmem:[#allocation7 + $0x28] sm:$0xff]
        %v660 = vld [vmem:[#allocation7 + $0x78] sm:$0xff]
        %v661 = vld [vmem:[#allocation7 + $0x80] sm:$0xff]
        %v662 = vld [vmem:[#allocation7 + $0xd0] sm:$0xff]
        %v663 = vld [vmem:[#allocation7 + $0xd8] sm:$0xff]
        %v664 = vld [vmem:[#allocation7 + $0x128] sm:$0xff]
        %v665 = vld [vmem:[#allocation7 + $0x130] sm:$0xff]
        %v666 = vld [vmem:[#allocation7 + $0x180] sm:$0xff]
        %v667 = vld [vmem:[#allocation7 + $0x188] sm:$0xff]
        %v668 = vld [vmem:[#allocation7 + $0x1d8] sm:$0xff]
        %v669 = vld [vmem:[#allocation7 + $0x1e0] sm:$0xff]
        %v670 = vld [vmem:[#allocation7 + $0x230] sm:$0xff]
        %v671 = vld [vmem:[#allocation7 + $0x238] sm:$0xff]
        %v672 = vld [vmem:[#allocation7 + $0x288] sm:$0xff]
        %v673 = vld [vmem:[#allocation7 + $0x290] sm:$0xff]
        %v674 = vld [vmem:[#allocation7 + $0x2e0] sm:$0xff]
        %v675 = vld [vmem:[#allocation7 + $0x2e8] sm:$0xff]
        %v676 = vld [vmem:[#allocation7 + $0x338] sm:$0xff]
        %v677 = vld [vmem:[#allocation7 + $0x340] sm:$0xff]
        %v678 = vld [vmem:[#allocation7 + $0x390] sm:$0xff]
        %v679 = vld [vmem:[#allocation7 + $0x398] sm:$0xff]
        %v680 = vld [vmem:[#allocation7 + $0x3e8] sm:$0xff]
        %v681 = vld [vmem:[#allocation7 + $0x3f0] sm:$0xff]
        %v682 = vld [vmem:[#allocation7 + $0x440] sm:$0xff]
        %v683 = vld [vmem:[#allocation7 + $0x448] sm:$0xff]
        %v684 = vld [vmem:[#allocation7 + $0x498] sm:$0xff]
        %v685 = vld [vmem:[#allocation7 + $0x4a0] sm:$0xff]
        %v686 = vld [vmem:[#allocation7 + $0x4f0] sm:$0xff]
        %v687 = vld [vmem:[#allocation7 + $0x4f8] sm:$0xff]
        %v688 = vld [vmem:[#allocation7 + $0x548] sm:$0xff]
        %v689 = vld [vmem:[#allocation7 + $0x550] sm:$0xff]
        %v690 = vld [vmem:[#allocation8 + $0x4] sm:$0x3]
        %v692 = vlaneseq
        %v693 = vshrl.u32 %v692, 7
        %v694 = vsub.s32 0, %v693
        %v695 = vrot.slane %v690, %v694
        %v696 = vlaneseq
        %v697 = vshrl.u32 %v696, 7
        %v698 = vsub.s32 1, %v697
        %v699 = vrot.slane %v690, %v698
        %702 = vmatprep.subr.mxu0 %v689
        %703 = vmatpush1.msra.mxu0 %v688
        %704 = vmatprep.subr.mxu0 %v687
        %705 = vmatpush1.msra.mxu0 %v686
        %706 = vmatprep.subr.mxu0 %v685
        %707 = vmatpush1.msra.mxu0 %v684
        %708 = vmatprep.subr.mxu0 %v683
        %709 = vmatpush1.msra.mxu0 %v682
        %710 = vmatprep.subr.mxu0 %v681
        %711 = vmatpush1.msra.mxu0 %v680
        %712 = vmatprep.subr.mxu0 %v679
        %713 = vmatpush1.msra.mxu0 %v678
        %714 = vmatprep.subr.mxu0 %v677
        %715 = vmatpush1.msra.mxu0 %v676
        %716 = vmatprep.subr.mxu0 %v675
        %717 = vmatpush1.msra.mxu0 %v674
        %718 = vmatprep.subr.mxu0 %v673
        %719 = vmatpush1.msra.mxu0 %v672
        %720 = vmatprep.subr.mxu0 %v671
        %721 = vmatpush1.msra.mxu0 %v670
        %722 = vmatprep.subr.mxu0 %v669
        %723 = vmatpush1.msra.mxu0 %v668
        %724 = vmatprep.subr.mxu0 %v667
        %725 = vmatpush1.msra.mxu0 %v666
        %726 = vmatprep.subr.mxu0 %v665
        %727 = vmatpush1.msra.mxu0 %v664
        %728 = vmatprep.subr.mxu0 %v663
        %729 = vmatpush1.msra.mxu0 %v662
        %730 = vmatprep.subr.mxu0 %v661
        %731 = vmatpush1.msra.mxu0 %v660
        %732 = vmatprep.subr.mxu0 %v659
        %733 = vmatpush1.msra.mxu0 %v658
        %734 = vmatprep.subr.mxu0 0.0
        %735 = vmatpush2.msra.mxu0 0.0
        %736 = vmatprep.subr.mxu0 0.0
        %737 = vmatpush2.msra.mxu0 0.0
        %738 = vmatprep.subr.mxu0 0.0
        %739 = vmatpush2.msra.mxu0 0.0
        %740 = vmatprep.subr.mxu0 0.0
        %741 = vmatpush2.msra.mxu0 0.0
        %742 = vmatprep.subr.mxu0 0.0
        %743 = vmatpush2.msra.mxu0 0.0
        %744 = vmatprep.subr.mxu0 0.0
        %745 = vmatpush2.msra.mxu0 0.0
        %746 = vmatprep.subr.mxu0 0.0
        %747 = vmatpush2.msra.mxu0 0.0
        %748 = vmatprep.subr.mxu0 0.0
        %749 = vmatpush2.msra.mxu0 0.0
        %750 = vmatprep.subr.mxu0 0.0
        %751 = vmatpush2.msra.mxu0 0.0
        %752 = vmatprep.subr.mxu0 0.0
        %753 = vmatpush2.msra.mxu0 0.0
        %754 = vmatprep.subr.mxu0 0.0
        %755 = vmatpush2.msra.mxu0 0.0
        %756 = vmatprep.subr.mxu0 0.0
        %757 = vmatpush2.msra.mxu0 0.0
        %758 = vmatprep.subr.mxu0 0.0
        %759 = vmatpush2.msra.mxu0 0.0
        %760 = vmatprep.subr.mxu0 0.0
        %761 = vmatpush2.msra.mxu0 0.0
        %762 = vmatprep.subr.mxu0 0.0
        %763 = vmatpush2.msra.mxu0 0.0
        %764 = vmatprep.subr.mxu0 0.0
        %765 = vmatpush2.msra.mxu0 0.0
        %766 = vmatprep.mubr.f32.mxu0 0.0
        %767 = vmatmul.mubr.f32.gmra.mxu0 %v657
        %v768 = vpop.f32.mrf.mxu0
        %v769 = vadd.f32 %v695, %v768
        %v770 = vpop.f32.mrf.mxu0
        %v771 = vadd.f32 %v699, %v770
        %772 = vdwg.mxu0
        %v773 = vld [vmem:[%s239] sm:$0xff]
        %v774 = vmul.f32 %v771, 0.5
        %v775 = vmul.f32 %v774, 1.442695
        %v776 = vpow.pop %v775
        %v777 = vmul.f32 %v773, %v776
        %v778 = vadd.f32 %v769, %v777
        %v779 = vld [vmem:[#allocation7 + $0x30] sm:$0xff]
        %v780 = vld [vmem:[#allocation7 + $0x88] sm:$0xff]
        %v781 = vld [vmem:[#allocation7 + $0xe0] sm:$0xff]
        %v782 = vld [vmem:[#allocation7 + $0x138] sm:$0xff]
        %v783 = vld [vmem:[#allocation7 + $0x190] sm:$0xff]
        %v784 = vld [vmem:[#allocation7 + $0x1e8] sm:$0xff]
        %v785 = vld [vmem:[#allocation7 + $0x240] sm:$0xff]
        %v786 = vld [vmem:[#allocation7 + $0x298] sm:$0xff]
        %v787 = vld [vmem:[#allocation7 + $0x2f0] sm:$0xff]
        %v788 = vld [vmem:[#allocation7 + $0x348] sm:$0xff]
        %v789 = vld [vmem:[#allocation7 + $0x3a0] sm:$0xff]
        %v790 = vld [vmem:[#allocation7 + $0x3f8] sm:$0xff]
        %v791 = vld [vmem:[#allocation7 + $0x450] sm:$0xff]
        %v792 = vld [vmem:[#allocation7 + $0x4a8] sm:$0xff]
        %v793 = vld [vmem:[#allocation7 + $0x500] sm:$0xff]
        %v794 = vld [vmem:[#allocation7 + $0x558] sm:$0xff]
        %v795 = vld [vmem:[#allocation8 + $0x6] sm:$0x1]
        %v797 = vlaneseq
        %v798 = vshrl.u32 %v797, 7
        %v799 = vsub.s32 0, %v798
        %v800 = vrot.slane %v795, %v799
        %802 = vmatprep.subr.mxu0 0.0
        %803 = vmatpush1.msra.mxu0 %v794
        %804 = vmatprep.subr.mxu0 0.0
        %805 = vmatpush1.msra.mxu0 %v793
        %806 = vmatprep.subr.mxu0 0.0
        %807 = vmatpush1.msra.mxu0 %v792
        %808 = vmatprep.subr.mxu0 0.0
        %809 = vmatpush1.msra.mxu0 %v791
        %810 = vmatprep.subr.mxu0 0.0
        %811 = vmatpush1.msra.mxu0 %v790
        %812 = vmatprep.subr.mxu0 0.0
        %813 = vmatpush1.msra.mxu0 %v789
        %814 = vmatprep.subr.mxu0 0.0
        %815 = vmatpush1.msra.mxu0 %v788
        %816 = vmatprep.subr.mxu0 0.0
        %817 = vmatpush1.msra.mxu0 %v787
        %818 = vmatprep.subr.mxu0 0.0
        %819 = vmatpush1.msra.mxu0 %v786
        %820 = vmatprep.subr.mxu0 0.0
        %821 = vmatpush1.msra.mxu0 %v785
        %822 = vmatprep.subr.mxu0 0.0
        %823 = vmatpush1.msra.mxu0 %v784
        %824 = vmatprep.subr.mxu0 0.0
        %825 = vmatpush1.msra.mxu0 %v783
        %826 = vmatprep.subr.mxu0 0.0
        %827 = vmatpush1.msra.mxu0 %v782
        %828 = vmatprep.subr.mxu0 0.0
        %829 = vmatpush1.msra.mxu0 %v781
        %830 = vmatprep.subr.mxu0 0.0
        %831 = vmatpush1.msra.mxu0 %v780
        %832 = vmatprep.subr.mxu0 0.0
        %833 = vmatpush1.msra.mxu0 %v779
        %834 = vmatprep.subr.mxu0 0.0
        %835 = vmatpush2.msra.mxu0 0.0
        %836 = vmatprep.subr.mxu0 0.0
        %837 = vmatpush2.msra.mxu0 0.0
        %838 = vmatprep.subr.mxu0 0.0
        %839 = vmatpush2.msra.mxu0 0.0
        %840 = vmatprep.subr.mxu0 0.0
        %841 = vmatpush2.msra.mxu0 0.0
        %842 = vmatprep.subr.mxu0 0.0
        %843 = vmatpush2.msra.mxu0 0.0
        %844 = vmatprep.subr.mxu0 0.0
        %845 = vmatpush2.msra.mxu0 0.0
        %846 = vmatprep.subr.mxu0 0.0
        %847 = vmatpush2.msra.mxu0 0.0
        %848 = vmatprep.subr.mxu0 0.0
        %849 = vmatpush2.msra.mxu0 0.0
        %850 = vmatprep.subr.mxu0 0.0
        %851 = vmatpush2.msra.mxu0 0.0
        %852 = vmatprep.subr.mxu0 0.0
        %853 = vmatpush2.msra.mxu0 0.0
        %854 = vmatprep.subr.mxu0 0.0
        %855 = vmatpush2.msra.mxu0 0.0
        %856 = vmatprep.subr.mxu0 0.0
        %857 = vmatpush2.msra.mxu0 0.0
        %858 = vmatprep.subr.mxu0 0.0
        %859 = vmatpush2.msra.mxu0 0.0
        %860 = vmatprep.subr.mxu0 0.0
        %861 = vmatpush2.msra.mxu0 0.0
        %862 = vmatprep.subr.mxu0 0.0
        %863 = vmatpush2.msra.mxu0 0.0
        %864 = vmatprep.subr.mxu0 0.0
        %865 = vmatpush2.msra.mxu0 0.0
        %866 = vmatprep.mubr.f32.mxu0 0.0
        %867 = vmatmul.mubr.f32.gmra.mxu0 %v778
        %v868 = vpop.f32.mrf.mxu0
        %v869 = vadd.f32 %v800, %v868
        %v870 = vpop.f32.mrf.mxu0
        %871 = vdwg.mxu0
        %v872 = vmul.f32 %v869, 0.01
        %v873 = vmax.f32 %v869, %v872
        %v874 = vld [vmem:[#allocation7 + $0x38] sm:$0xff]
        %v875 = vld [vmem:[#allocation7 + $0x90] sm:$0xff]
        %v876 = vld [vmem:[#allocation7 + $0xe8] sm:$0xff]
        %v877 = vld [vmem:[#allocation7 + $0x140] sm:$0xff]
        %v878 = vld [vmem:[#allocation7 + $0x198] sm:$0xff]
        %v879 = vld [vmem:[#allocation7 + $0x1f0] sm:$0xff]
        %v880 = vld [vmem:[#allocation7 + $0x248] sm:$0xff]
        %v881 = vld [vmem:[#allocation7 + $0x2a0] sm:$0xff]
        %v882 = vld [vmem:[#allocation7 + $0x2f8] sm:$0xff]
        %v883 = vld [vmem:[#allocation7 + $0x350] sm:$0xff]
        %v884 = vld [vmem:[#allocation7 + $0x3a8] sm:$0xff]
        %v885 = vld [vmem:[#allocation7 + $0x400] sm:$0xff]
        %v886 = vld [vmem:[#allocation7 + $0x458] sm:$0xff]
        %v887 = vld [vmem:[#allocation7 + $0x4b0] sm:$0xff]
        %v888 = vld [vmem:[#allocation7 + $0x508] sm:$0xff]
        %v889 = vld [vmem:[#allocation7 + $0x560] sm:$0xff]
        %v890 = vld [vmem:[#allocation8 + $0x7] sm:$0x1]
        %v892 = vlaneseq
        %v893 = vshrl.u32 %v892, 7
        %v894 = vsub.s32 0, %v893
        %v895 = vrot.slane %v890, %v894
        %897 = vmatprep.subr.mxu0 0.0
        %898 = vmatpush1.msra.mxu0 %v889
        %899 = vmatprep.subr.mxu0 0.0
        %900 = vmatpush1.msra.mxu0 %v888
        %901 = vmatprep.subr.mxu0 0.0
        %902 = vmatpush1.msra.mxu0 %v887
        %903 = vmatprep.subr.mxu0 0.0
        %904 = vmatpush1.msra.mxu0 %v886
        %905 = vmatprep.subr.mxu0 0.0
        %906 = vmatpush1.msra.mxu0 %v885
        %907 = vmatprep.subr.mxu0 0.0
        %908 = vmatpush1.msra.mxu0 %v884
        %909 = vmatprep.subr.mxu0 0.0
        %910 = vmatpush1.msra.mxu0 %v883
        %911 = vmatprep.subr.mxu0 0.0
        %912 = vmatpush1.msra.mxu0 %v882
        %913 = vmatprep.subr.mxu0 0.0
        %914 = vmatpush1.msra.mxu0 %v881
        %915 = vmatprep.subr.mxu0 0.0
        %916 = vmatpush1.msra.mxu0 %v880
        %917 = vmatprep.subr.mxu0 0.0
        %918 = vmatpush1.msra.mxu0 %v879
        %919 = vmatprep.subr.mxu0 0.0
        %920 = vmatpush1.msra.mxu0 %v878
        %921 = vmatprep.subr.mxu0 0.0
        %922 = vmatpush1.msra.mxu0 %v877
        %923 = vmatprep.subr.mxu0 0.0
        %924 = vmatpush1.msra.mxu0 %v876
        %925 = vmatprep.subr.mxu0 0.0
        %926 = vmatpush1.msra.mxu0 %v875
        %927 = vmatprep.subr.mxu0 0.0
        %928 = vmatpush1.msra.mxu0 %v874
        %929 = vmatprep.subr.mxu0 0.0
        %930 = vmatpush2.msra.mxu0 0.0
        %931 = vmatprep.subr.mxu0 0.0
        %932 = vmatpush2.msra.mxu0 0.0
        %933 = vmatprep.subr.mxu0 0.0
        %934 = vmatpush2.msra.mxu0 0.0
        %935 = vmatprep.subr.mxu0 0.0
        %936 = vmatpush2.msra.mxu0 0.0
        %937 = vmatprep.subr.mxu0 0.0
        %938 = vmatpush2.msra.mxu0 0.0
        %939 = vmatprep.subr.mxu0 0.0
        %940 = vmatpush2.msra.mxu0 0.0
        %941 = vmatprep.subr.mxu0 0.0
        %942 = vmatpush2.msra.mxu0 0.0
        %943 = vmatprep.subr.mxu0 0.0
        %944 = vmatpush2.msra.mxu0 0.0
        %945 = vmatprep.subr.mxu0 0.0
        %946 = vmatpush2.msra.mxu0 0.0
        %947 = vmatprep.subr.mxu0 0.0
        %948 = vmatpush2.msra.mxu0 0.0
        %949 = vmatprep.subr.mxu0 0.0
        %950 = vmatpush2.msra.mxu0 0.0
        %951 = vmatprep.subr.mxu0 0.0
        %952 = vmatpush2.msra.mxu0 0.0
        %953 = vmatprep.subr.mxu0 0.0
        %954 = vmatpush2.msra.mxu0 0.0
        %955 = vmatprep.subr.mxu0 0.0
        %956 = vmatpush2.msra.mxu0 0.0
        %957 = vmatprep.subr.mxu0 0.0
        %958 = vmatpush2.msra.mxu0 0.0
        %959 = vmatprep.subr.mxu0 0.0
        %960 = vmatpush2.msra.mxu0 0.0
        %961 = vmatprep.mubr.f32.mxu0 0.0
        %962 = vmatmul.mubr.f32.gmra.mxu0 %v873
        %v963 = vpop.f32.mrf.mxu0
        %v964 = vadd.f32 %v895, %v963
        %v965 = vpop.f32.mrf.mxu0
        %966 = vdwg.mxu0
        %v967 = vmul.f32 %v964, 0.01
        %v968 = vmax.f32 %v964, %v967
        %v969 = vld [vmem:[#allocation7 + $0x40] sm:$0xff]
        %v970 = vld [vmem:[#allocation7 + $0x98] sm:$0xff]
        %v971 = vld [vmem:[#allocation7 + $0xf0] sm:$0xff]
        %v972 = vld [vmem:[#allocation7 + $0x148] sm:$0xff]
        %v973 = vld [vmem:[#allocation7 + $0x1a0] sm:$0xff]
        %v974 = vld [vmem:[#allocation7 + $0x1f8] sm:$0xff]
        %v975 = vld [vmem:[#allocation7 + $0x250] sm:$0xff]
        %v976 = vld [vmem:[#allocation7 + $0x2a8] sm:$0xff]
        %v977 = vld [vmem:[#allocation7 + $0x300] sm:$0xff]
        %v978 = vld [vmem:[#allocation7 + $0x358] sm:$0xff]
        %v979 = vld [vmem:[#allocation7 + $0x3b0] sm:$0xff]
        %v980 = vld [vmem:[#allocation7 + $0x408] sm:$0xff]
        %v981 = vld [vmem:[#allocation7 + $0x460] sm:$0xff]
        %v982 = vld [vmem:[#allocation7 + $0x4b8] sm:$0xff]
        %v983 = vld [vmem:[#allocation7 + $0x510] sm:$0xff]
        %v984 = vld [vmem:[#allocation7 + $0x568] sm:$0xff]
        %v985 = vld [vmem:[#allocation8 + $0x8] sm:$0x1]
        %v987 = vlaneseq
        %v988 = vshrl.u32 %v987, 7
        %v989 = vsub.s32 0, %v988
        %v990 = vrot.slane %v985, %v989
        %992 = vmatprep.subr.mxu0 0.0
        %993 = vmatpush1.msra.mxu0 %v984
        %994 = vmatprep.subr.mxu0 0.0
        %995 = vmatpush1.msra.mxu0 %v983
        %996 = vmatprep.subr.mxu0 0.0
        %997 = vmatpush1.msra.mxu0 %v982
        %998 = vmatprep.subr.mxu0 0.0
        %999 = vmatpush1.msra.mxu0 %v981
        %1000 = vmatprep.subr.mxu0 0.0
        %1001 = vmatpush1.msra.mxu0 %v980
        %1002 = vmatprep.subr.mxu0 0.0
        %1003 = vmatpush1.msra.mxu0 %v979
        %1004 = vmatprep.subr.mxu0 0.0
        %1005 = vmatpush1.msra.mxu0 %v978
        %1006 = vmatprep.subr.mxu0 0.0
        %1007 = vmatpush1.msra.mxu0 %v977
        %1008 = vmatprep.subr.mxu0 0.0
        %1009 = vmatpush1.msra.mxu0 %v976
        %1010 = vmatprep.subr.mxu0 0.0
        %1011 = vmatpush1.msra.mxu0 %v975
        %1012 = vmatprep.subr.mxu0 0.0
        %1013 = vmatpush1.msra.mxu0 %v974
        %1014 = vmatprep.subr.mxu0 0.0
        %1015 = vmatpush1.msra.mxu0 %v973
        %1016 = vmatprep.subr.mxu0 0.0
        %1017 = vmatpush1.msra.mxu0 %v972
        %1018 = vmatprep.subr.mxu0 0.0
        %1019 = vmatpush1.msra.mxu0 %v971
        %1020 = vmatprep.subr.mxu0 0.0
        %1021 = vmatpush1.msra.mxu0 %v970
        %1022 = vmatprep.subr.mxu0 0.0
        %1023 = vmatpush1.msra.mxu0 %v969
        %1024 = vmatprep.subr.mxu0 0.0
        %1025 = vmatpush2.msra.mxu0 0.0
        %1026 = vmatprep.subr.mxu0 0.0
        %1027 = vmatpush2.msra.mxu0 0.0
        %1028 = vmatprep.subr.mxu0 0.0
        %1029 = vmatpush2.msra.mxu0 0.0
        %1030 = vmatprep.subr.mxu0 0.0
        %1031 = vmatpush2.msra.mxu0 0.0
        %1032 = vmatprep.subr.mxu0 0.0
        %1033 = vmatpush2.msra.mxu0 0.0
        %1034 = vmatprep.subr.mxu0 0.0
        %1035 = vmatpush2.msra.mxu0 0.0
        %1036 = vmatprep.subr.mxu0 0.0
        %1037 = vmatpush2.msra.mxu0 0.0
        %1038 = vmatprep.subr.mxu0 0.0
        %1039 = vmatpush2.msra.mxu0 0.0
        %1040 = vmatprep.subr.mxu0 0.0
        %1041 = vmatpush2.msra.mxu0 0.0
        %1042 = vmatprep.subr.mxu0 0.0
        %1043 = vmatpush2.msra.mxu0 0.0
        %1044 = vmatprep.subr.mxu0 0.0
        %1045 = vmatpush2.msra.mxu0 0.0
        %1046 = vmatprep.subr.mxu0 0.0
        %1047 = vmatpush2.msra.mxu0 0.0
        %1048 = vmatprep.subr.mxu0 0.0
        %1049 = vmatpush2.msra.mxu0 0.0
        %1050 = vmatprep.subr.mxu0 0.0
        %1051 = vmatpush2.msra.mxu0 0.0
        %1052 = vmatprep.subr.mxu0 0.0
        %1053 = vmatpush2.msra.mxu0 0.0
        %1054 = vmatprep.subr.mxu0 0.0
        %1055 = vmatpush2.msra.mxu0 0.0
        %1056 = vmatprep.mubr.f32.mxu0 0.0
        %1057 = vmatmul.mubr.f32.gmra.mxu0 %v968
        %v1058 = vpop.f32.mrf.mxu0
        %v1059 = vadd.f32 %v990, %v1058
        %v1060 = vpop.f32.mrf.mxu0
        %1061 = vdwg.mxu0
        %v1062 = vmul.f32 %v1059, 0.01
        %v1063 = vmax.f32 %v1059, %v1062
        %v1064 = vld [vmem:[#allocation7 + $0x48] sm:$0xff]
        %v1065 = vld [vmem:[#allocation7 + $0xa0] sm:$0xff]
        %v1066 = vld [vmem:[#allocation7 + $0xf8] sm:$0xff]
        %v1067 = vld [vmem:[#allocation7 + $0x150] sm:$0xff]
        %v1068 = vld [vmem:[#allocation7 + $0x1a8] sm:$0xff]
        %v1069 = vld [vmem:[#allocation7 + $0x200] sm:$0xff]
        %v1070 = vld [vmem:[#allocation7 + $0x258] sm:$0xff]
        %v1071 = vld [vmem:[#allocation7 + $0x2b0] sm:$0xff]
        %v1072 = vld [vmem:[#allocation7 + $0x308] sm:$0xff]
        %v1073 = vld [vmem:[#allocation7 + $0x360] sm:$0xff]
        %v1074 = vld [vmem:[#allocation7 + $0x3b8] sm:$0xff]
        %v1075 = vld [vmem:[#allocation7 + $0x410] sm:$0xff]
        %v1076 = vld [vmem:[#allocation7 + $0x468] sm:$0xff]
        %v1077 = vld [vmem:[#allocation7 + $0x4c0] sm:$0xff]
        %v1078 = vld [vmem:[#allocation7 + $0x518] sm:$0xff]
        %v1079 = vld [vmem:[#allocation7 + $0x570] sm:$0xff]
        %v1080 = vld [vmem:[#allocation8 + $0x9] sm:$0x1]
        %v1082 = vlaneseq
        %v1083 = vshrl.u32 %v1082, 7
        %v1084 = vsub.s32 0, %v1083
        %v1085 = vrot.slane %v1080, %v1084
        %1087 = vmatprep.subr.mxu0 0.0
        %1088 = vmatpush1.msra.mxu0 %v1079
        %1089 = vmatprep.subr.mxu0 0.0
        %1090 = vmatpush1.msra.mxu0 %v1078
        %1091 = vmatprep.subr.mxu0 0.0
        %1092 = vmatpush1.msra.mxu0 %v1077
        %1093 = vmatprep.subr.mxu0 0.0
        %1094 = vmatpush1.msra.mxu0 %v1076
        %1095 = vmatprep.subr.mxu0 0.0
        %1096 = vmatpush1.msra.mxu0 %v1075
        %1097 = vmatprep.subr.mxu0 0.0
        %1098 = vmatpush1.msra.mxu0 %v1074
        %1099 = vmatprep.subr.mxu0 0.0
        %1100 = vmatpush1.msra.mxu0 %v1073
        %1101 = vmatprep.subr.mxu0 0.0
        %1102 = vmatpush1.msra.mxu0 %v1072
        %1103 = vmatprep.subr.mxu0 0.0
        %1104 = vmatpush1.msra.mxu0 %v1071
        %1105 = vmatprep.subr.mxu0 0.0
        %1106 = vmatpush1.msra.mxu0 %v1070
        %1107 = vmatprep.subr.mxu0 0.0
        %1108 = vmatpush1.msra.mxu0 %v1069
        %1109 = vmatprep.subr.mxu0 0.0
        %1110 = vmatpush1.msra.mxu0 %v1068
        %1111 = vmatprep.subr.mxu0 0.0
        %1112 = vmatpush1.msra.mxu0 %v1067
        %1113 = vmatprep.subr.mxu0 0.0
        %1114 = vmatpush1.msra.mxu0 %v1066
        %1115 = vmatprep.subr.mxu0 0.0
        %1116 = vmatpush1.msra.mxu0 %v1065
        %1117 = vmatprep.subr.mxu0 0.0
        %1118 = vmatpush1.msra.mxu0 %v1064
        %1119 = vmatprep.subr.mxu0 0.0
        %1120 = vmatpush2.msra.mxu0 0.0
        %1121 = vmatprep.subr.mxu0 0.0
        %1122 = vmatpush2.msra.mxu0 0.0
        %1123 = vmatprep.subr.mxu0 0.0
        %1124 = vmatpush2.msra.mxu0 0.0
        %1125 = vmatprep.subr.mxu0 0.0
        %1126 = vmatpush2.msra.mxu0 0.0
        %1127 = vmatprep.subr.mxu0 0.0
        %1128 = vmatpush2.msra.mxu0 0.0
        %1129 = vmatprep.subr.mxu0 0.0
        %1130 = vmatpush2.msra.mxu0 0.0
        %1131 = vmatprep.subr.mxu0 0.0
        %1132 = vmatpush2.msra.mxu0 0.0
        %1133 = vmatprep.subr.mxu0 0.0
        %1134 = vmatpush2.msra.mxu0 0.0
        %1135 = vmatprep.subr.mxu0 0.0
        %1136 = vmatpush2.msra.mxu0 0.0
        %1137 = vmatprep.subr.mxu0 0.0
        %1138 = vmatpush2.msra.mxu0 0.0
        %1139 = vmatprep.subr.mxu0 0.0
        %1140 = vmatpush2.msra.mxu0 0.0
        %1141 = vmatprep.subr.mxu0 0.0
        %1142 = vmatpush2.msra.mxu0 0.0
        %1143 = vmatprep.subr.mxu0 0.0
        %1144 = vmatpush2.msra.mxu0 0.0
        %1145 = vmatprep.subr.mxu0 0.0
        %1146 = vmatpush2.msra.mxu0 0.0
        %1147 = vmatprep.subr.mxu0 0.0
        %1148 = vmatpush2.msra.mxu0 0.0
        %1149 = vmatprep.subr.mxu0 0.0
        %1150 = vmatpush2.msra.mxu0 0.0
        %1151 = vmatprep.mubr.f32.mxu0 0.0
        %1152 = vmatmul.mubr.f32.gmra.mxu0 %v1063
        %v1153 = vpop.f32.mrf.mxu0
        %v1154 = vadd.f32 %v1085, %v1153
        %v1155 = vpop.f32.mrf.mxu0
        %1156 = vdwg.mxu0
        %v1157 = vmul.f32 %v1154, 0.01
        %v1158 = vmax.f32 %v1154, %v1157
        %v1159 = vld [vmem:[#allocation7 + $0x50] sm:$0xff]
        %v1160 = vld [vmem:[#allocation7 + $0xa8] sm:$0xff]
        %v1161 = vld [vmem:[#allocation7 + $0x100] sm:$0xff]
        %v1162 = vld [vmem:[#allocation7 + $0x158] sm:$0xff]
        %v1163 = vld [vmem:[#allocation7 + $0x1b0] sm:$0xff]
        %v1164 = vld [vmem:[#allocation7 + $0x208] sm:$0xff]
        %v1165 = vld [vmem:[#allocation7 + $0x260] sm:$0xff]
        %v1166 = vld [vmem:[#allocation7 + $0x2b8] sm:$0xff]
        %v1167 = vld [vmem:[#allocation7 + $0x310] sm:$0xff]
        %v1168 = vld [vmem:[#allocation7 + $0x368] sm:$0xff]
        %v1169 = vld [vmem:[#allocation7 + $0x3c0] sm:$0xff]
        %v1170 = vld [vmem:[#allocation7 + $0x418] sm:$0xff]
        %v1171 = vld [vmem:[#allocation7 + $0x470] sm:$0xff]
        %v1172 = vld [vmem:[#allocation7 + $0x4c8] sm:$0xff]
        %v1173 = vld [vmem:[#allocation7 + $0x520] sm:$0xff]
        %v1174 = vld [vmem:[#allocation7 + $0x578] sm:$0xff]
        %v1175 = vld [vmem:[#allocation8 + $0xa] sm:$0x1]
        %v1177 = vlaneseq
        %v1178 = vshrl.u32 %v1177, 7
        %v1179 = vsub.s32 0, %v1178
        %v1180 = vrot.slane %v1175, %v1179
        %1182 = vmatprep.subr.mxu0 0.0
        %1183 = vmatpush1.msra.mxu0 %v1174
        %1184 = vmatprep.subr.mxu0 0.0
        %1185 = vmatpush1.msra.mxu0 %v1173
        %1186 = vmatprep.subr.mxu0 0.0
        %1187 = vmatpush1.msra.mxu0 %v1172
        %1188 = vmatprep.subr.mxu0 0.0
        %1189 = vmatpush1.msra.mxu0 %v1171
        %1190 = vmatprep.subr.mxu0 0.0
        %1191 = vmatpush1.msra.mxu0 %v1170
        %1192 = vmatprep.subr.mxu0 0.0
        %1193 = vmatpush1.msra.mxu0 %v1169
        %1194 = vmatprep.subr.mxu0 0.0
        %1195 = vmatpush1.msra.mxu0 %v1168
        %1196 = vmatprep.subr.mxu0 0.0
        %1197 = vmatpush1.msra.mxu0 %v1167
        %1198 = vmatprep.subr.mxu0 0.0
        %1199 = vmatpush1.msra.mxu0 %v1166
        %1200 = vmatprep.subr.mxu0 0.0
        %1201 = vmatpush1.msra.mxu0 %v1165
        %1202 = vmatprep.subr.mxu0 0.0
        %1203 = vmatpush1.msra.mxu0 %v1164
        %1204 = vmatprep.subr.mxu0 0.0
        %1205 = vmatpush1.msra.mxu0 %v1163
        %1206 = vmatprep.subr.mxu0 0.0
        %1207 = vmatpush1.msra.mxu0 %v1162
        %1208 = vmatprep.subr.mxu0 0.0
        %1209 = vmatpush1.msra.mxu0 %v1161
        %1210 = vmatprep.subr.mxu0 0.0
        %1211 = vmatpush1.msra.mxu0 %v1160
        %1212 = vmatprep.subr.mxu0 0.0
        %1213 = vmatpush1.msra.mxu0 %v1159
        %1214 = vmatprep.subr.mxu0 0.0
        %1215 = vmatpush2.msra.mxu0 0.0
        %1216 = vmatprep.subr.mxu0 0.0
        %1217 = vmatpush2.msra.mxu0 0.0
        %1218 = vmatprep.subr.mxu0 0.0
        %1219 = vmatpush2.msra.mxu0 0.0
        %1220 = vmatprep.subr.mxu0 0.0
        %1221 = vmatpush2.msra.mxu0 0.0
        %1222 = vmatprep.subr.mxu0 0.0
        %1223 = vmatpush2.msra.mxu0 0.0
        %1224 = vmatprep.subr.mxu0 0.0
        %1225 = vmatpush2.msra.mxu0 0.0
        %1226 = vmatprep.subr.mxu0 0.0
        %1227 = vmatpush2.msra.mxu0 0.0
        %1228 = vmatprep.subr.mxu0 0.0
        %1229 = vmatpush2.msra.mxu0 0.0
        %1230 = vmatprep.subr.mxu0 0.0
        %1231 = vmatpush2.msra.mxu0 0.0
        %1232 = vmatprep.subr.mxu0 0.0
        %1233 = vmatpush2.msra.mxu0 0.0
        %1234 = vmatprep.subr.mxu0 0.0
        %1235 = vmatpush2.msra.mxu0 0.0
        %1236 = vmatprep.subr.mxu0 0.0
        %1237 = vmatpush2.msra.mxu0 0.0
        %1238 = vmatprep.subr.mxu0 0.0
        %1239 = vmatpush2.msra.mxu0 0.0
        %1240 = vmatprep.subr.mxu0 0.0
        %1241 = vmatpush2.msra.mxu0 0.0
        %1242 = vmatprep.subr.mxu0 0.0
        %1243 = vmatpush2.msra.mxu0 0.0
        %1244 = vmatprep.subr.mxu0 0.0
        %1245 = vmatpush2.msra.mxu0 0.0
        %1246 = vmatprep.mubr.f32.mxu0 0.0
        %1247 = vmatmul.mubr.f32.gmra.mxu0 %v1158
        %v1248 = vpop.f32.mrf.mxu0
        %v1249 = vadd.f32 %v1180, %v1248
        %v1250 = vpop.f32.mrf.mxu0
        %1251 = vdwg.mxu0
        %1252 = vst [vmem:[%s276] sm:$0xff] %v1249
        %1253 = vst [vmem:[%s276 + $0x8] sm:$0xff] %v769
        %1254 = vst [vmem:[%s276 + $0x10] sm:$0xff] %v771
        %1255 = vst [vmem:[%s276 + $0x18] sm:$0xff] %v778
        %s1256 = sand.u32 %s127, 1
        %s1257 = scalar_lea.sflag [#allocation4], %s1256
        %s1258 = sand.u32 %s127, 1
        %s1259 = smul.addr %s1258, 32
        %s1260 = scalar_lea.vmem [#allocation10], %s1259
        // Predicated region
        $region53: #{tpu_custom_call.1} parent=35 // pred_check
          %p1261 = pneg %p137
        $region54: #{tpu_custom_call.1} parent=35 // pred_check_branch
          %1263 = sbr.rel (%p1261) target = $region56
        $region55: #{tpu_custom_call.1} parent=35 // pred_region
          %s1265 = ssub.s32 512, 512
          %1266 = vsyncadd %s1257, %s1265
          %s1267 = smul.addr %s25, 4
          %s1268 = smul.addr %s1267, 128
          %s1269 = scalar_lea.hbm %s4, %s1268
          %s1271 = sshll.u32 %s1260, 4
          %s1272 = int_to_ptr.vmem [resolvable:$true] %s1271
          %1274 = dma.vmem_to_hbm [thread:$0]  %s1272, 512, %s1269, %s1257
        $region56: #{tpu_custom_call.1} parent=35 // pred_fallthru
          _
      $region36: #{tpu_custom_call.1} parent=5 // pred_fallthru
        _
      %p1275 = scmp.le.s32.totalorder 2, %s20
      // Predicated region
      $region57: #{tpu_custom_call.1} parent=5 // pred_check
        %p1276 = pneg %p1275
      $region58: #{tpu_custom_call.1} parent=5 // pred_check_branch
        %1278 = sbr.rel (%p1276) target = $region60
      $region59: #{tpu_custom_call.1} parent=5 // pred_region
        %s1279 = ssub.s32 %s20, 2
        // Predicated region
        $region61: #{tpu_custom_call.1} parent=59 // pred_check
          %p1280 = pneg %p143
        $region62: #{tpu_custom_call.1} parent=59 // pred_check_branch
          %1282 = sbr.rel (%p1280) target = $region64
        $region63: #{tpu_custom_call.1} parent=59 // pred_region
          %s1283 = sand.u32 %s128, 1
          %s1284 = scalar_lea.sflag [#allocation4], %s1283
          %s1285 = sand.u32 %s128, 1
          %s1286 = smul.addr %s1285, 32
          %s1287 = scalar_lea.vmem [#allocation10], %s1286
          %1288 = dma.done %s1284, 512
        $region64: #{tpu_custom_call.1} parent=59 // pred_fallthru
          _
      $region60: #{tpu_custom_call.1} parent=5 // pred_fallthru
        _
    $region6: #{tpu_custom_call.1} parent=1 // loop_footer
      %s24 = sadd.s32 1, %s20
    $region7: #{tpu_custom_call.1} parent=1 // loop_footer_branch
      %19 = sbr.rel target = $region3
    $region8: #{tpu_custom_call.1} parent=1 // loop_exit
      _
    %1289 = vsyncpa [#allocation3], 1
    %s1290 = scalar_lea.sflag [#allocation3], 1
    %1291 = vsyncpa %s1290, 1
    %1292 = vsyncpa [#allocation6], 1
    %s1293 = scalar_lea.sflag [#allocation6], 1
    %1294 = vsyncpa %s1293, 1
    %1295 = vsyncpa [#allocation9], 1
    %1296 = vsyncpa [#allocation4], 1
    %s1297 = scalar_lea.sflag [#allocation4], 1
    %1298 = vsyncpa %s1297, 1

</llo_original>
